<compile_context>
chip_gen: v5e
topology: v5e:2x2
jax: 0.10.0
libtpu: 0.0.40
codegen_flags: <defaults>
</compile_context>

<pallas_src>
import functools
import math

import jax
import jax.numpy as jnp
import numpy as np
from jax import lax
from jax.experimental import pallas as pl
from jax.experimental.pallas import tpu as pltpu


# --------------------------------------------------------------------------------------
# Kernel
# --------------------------------------------------------------------------------------
def _msa_kernel(x_ref,
                wqt_ref, bq_ref, wkt_ref, bk_ref, wvt_ref, bv_ref,
                wot_ref, bo_ref,
                out_ref, *rest,
                num_heads, compute_dtype, need_weights):
    """One grid step: fused projections + per-head attention for a (B, L, E) tile."""
    if need_weights:
        attn_ref, q_scr, k_scr, v_scr, o_slab = rest
    else:
        attn_ref = None
        q_scr, k_scr, v_scr, o_slab = rest

    B, L, E = x_ref.shape
    H = num_heads
    Dh = E // H
    f32 = jnp.float32
    cd = compute_dtype
    inv_h = 1.0 / H
    # Exact divide on the full-precision path, EUP approx reciprocal on the fast path.
    approx = np.dtype(cd) != np.dtype(np.float32)

    # Fused (outer Linear ∘ in_proj) projections over the whole (B*L, E) tile: one MXU
    # matmul each with a large M dimension; bias broadcast added once (hoisted out of the
    # batch loop); results parked in VMEM scratch in the compute dtype.  The softmax scale
    # is pre-folded into the q weight/bias by the wrapper.
    xm = x_ref[...].reshape(B * L, E).astype(cd)
    q_scr[...] = (jnp.dot(xm, wqt_ref[...], preferred_element_type=f32)
                  + bq_ref[...]).reshape(B, L, E).astype(q_scr.dtype)
    k_scr[...] = (jnp.dot(xm, wkt_ref[...], preferred_element_type=f32)
                  + bk_ref[...]).reshape(B, L, E).astype(k_scr.dtype)
    v_scr[...] = (jnp.dot(xm, wvt_ref[...], preferred_element_type=f32)
                  + bv_ref[...]).reshape(B, L, E).astype(v_scr.dtype)

    def batch_body(b, carry):
        # fori_loop keeps vreg live ranges bounded to a single batch element.
        q_b = q_scr[b]            # (L, E) compute dtype
        k_b = k_scr[b]
        v_b = v_scr[b]
        # Static head loop: dynamic lane-dim slicing at non-128-aligned offsets is not
        # cleanly supported; with only one batch element live, pressure stays bounded.
        for h in range(H):
            sl = slice(h * Dh, (h + 1) * Dh)
            q_h = q_b[:, sl]
            k_h = k_b[:, sl]
            v_h = v_b[:, sl]
            # QK^T with contraction on the last dim of both operands: no materialised K^T.
            s = lax.dot_general(q_h, k_h, (((1,), (1,)), ((), ())),
                                preferred_element_type=f32)            # (L, L) f32
            s = s - jnp.max(s, axis=-1, keepdims=True)
            e = jnp.exp(s)
            p = e * pl.reciprocal(jnp.sum(e, axis=-1, keepdims=True), approx=approx)
            if attn_ref is not None:
                # Head-averaged attention weights accumulate straight into the VMEM output
                # block (no (L, L) vreg accumulator).
                contrib = (p * inv_h).astype(attn_ref.dtype)
                if h == 0:
                    attn_ref[b] = contrib
                else:
                    attn_ref[b] = attn_ref[b] + contrib
            # Head output goes into the VMEM slab (no lane-dim concatenate).
            o_slab[:, sl] = jnp.dot(p.astype(cd), v_h,
                                    preferred_element_type=f32).astype(o_slab.dtype)
        # Single output projection over the assembled slab.
        out = (jnp.dot(o_slab[...].astype(cd), wot_ref[...],
                       preferred_element_type=f32) + bo_ref[...])
        out_ref[b] = out.astype(out_ref.dtype)
        return carry

    lax.fori_loop(0, B, batch_body, 0)


# --------------------------------------------------------------------------------------
# Per-generation VMEM budgeting / block selection
# --------------------------------------------------------------------------------------
def _tpu_vmem_capacity_bytes():
    try:
        info = pltpu.get_tpu_info()
        cap = getattr(info, "vmem_capacity_bytes", None)
        if cap:
            return int(cap)
    except Exception:
        pass
    return 64 << 20          # conservative (v7x-sized) fallback


def _num_tensorcores():
    """Best effort; only used to keep >= 2 grid steps on multi-TensorCore chips."""
    try:
        info = pltpu.get_tpu_info()
        for attr in ("num_cores", "core_count", "num_tensorcores"):
            val = getattr(info, attr, None)
            if val:
                return int(val)
    except Exception:
        pass
    try:
        dev = jax.devices()[0]
        for attr in ("num_cores", "core_count"):
            val = getattr(dev, attr, None)
            if val:
                return int(val)
    except Exception:
        pass
    return 1


def _tile_vmem_bytes(bb, L, E, compute_dtype, need_weights, weights_dtype):
    """Estimated VMEM footprint for one grid step with batch_block = bb."""
    cdb = np.dtype(compute_dtype).itemsize
    wdb = np.dtype(weights_dtype).itemsize
    io = 4 * bb * L * E * 4                        # x + out tiles, double-buffered, f32
    if need_weights:
        io += 2 * bb * L * L * wdb                 # attn tile, double-buffered
    scratch = (3 * bb * L * E + L * E) * max(cdb, 4)   # q/k/v scratch + slab (worst case)
    weights = 2 * (4 * E * E * cdb + 4 * E * 4)    # worst case: double-buffered weights
    temps = 2 * bb * L * E * 4 + 4 * L * L * 4     # f32 projection / softmax temporaries
    return io + scratch + weights + temps


def _pick_batch_block(N, L, E, compute_dtype, need_weights, weights_dtype,
                      budget, num_cores):
    """Largest divisor of N whose tile fits the per-generation VMEM budget; on
    multi-TensorCore chips keep >= 2 'parallel' grid steps when possible."""
    best = 1
    for cand in range(1, N + 1):
        if N % cand:
            continue
        if num_cores >= 2 and N >= 2 and N // cand < 2:
            continue
        if _tile_vmem_bytes(cand, L, E, compute_dtype, need_weights,
                            weights_dtype) <= budget:
            best = cand
    return best


# --------------------------------------------------------------------------------------
# Wrapper
# --------------------------------------------------------------------------------------
def multi_self_attention(x, params, num_heads, *, compute_dtype=jnp.bfloat16,
                         need_weights=True, weights_dtype=jnp.float32,
                         batch_block=None):
    """x: (L, N, E) float32.  Returns (attn_output (L, N, E) f32,
    attn_weights (N, L, L) weights_dtype | None)."""
    L, N, E = x.shape
    assert E % num_heads == 0
    Dh = E // num_heads
    f32 = jnp.float32
    hi = jax.lax.Precision.HIGHEST

    # ---- Offline algebraic fusion: (outer Linear) then (MHA in_proj) == one Linear.
    #      q = (x Wq^T + bq) Wiq^T + biq = x (Wiq Wq)^T + (bq Wiq^T + biq);
    #      the softmax scale 1/sqrt(Dh) is folded into the fused q weight/bias.
    scale = 1.0 / math.sqrt(Dh)
    wqt = (jnp.matmul(params["wq"].T, params["wiq"].T, precision=hi) * scale).astype(compute_dtype)
    bq = ((jnp.matmul(params["bq"], params["wiq"].T, precision=hi) + params["biq"]) * scale).astype(f32)
    wkt = jnp.matmul(params["wk"].T, params["wik"].T, precision=hi).astype(compute_dtype)
    bk = (jnp.matmul(params["bk"], params["wik"].T, precision=hi) + params["bik"]).astype(f32)
    wvt = jnp.matmul(params["wv"].T, params["wiv"].T, precision=hi).astype(compute_dtype)
    bv = (jnp.matmul(params["bv"], params["wiv"].T, precision=hi) + params["biv"]).astype(f32)
    wot = params["wo"].T.astype(compute_dtype)
    bo = params["bo"].astype(f32)

    # Batch-major layout for clean (batch_block, L, E) tiles.
    # TODO(synk): the (L,N,E) <-> (N,L,E) wrapper transposes remain; removing them needs
    # (L,1,E)-style blocks or in-kernel batch relayouts with shape-dependent Mosaic support.
    x_nle = jnp.transpose(x, (1, 0, 2))                      # (N, L, E)

    budget = int(_tpu_vmem_capacity_bytes() * 0.8)           # real headroom per generation
    num_cores = _num_tensorcores()
    if batch_block is None:
        batch_block = _pick_batch_block(N, L, E, compute_dtype, need_weights,
                                        weights_dtype, budget, num_cores)
    assert N % batch_block == 0
    grid = (N // batch_block,)

    # Per-head slab stores are lane-aligned only when Dh % 128 == 0; keep the slab f32
    # otherwise (the previously validated masked-store path).
    slab_dtype = compute_dtype if Dh % 128 == 0 else f32

    out_shape = [jax.ShapeDtypeStruct((N, L, E), f32)]
    if need_weights:
        out_shape.append(jax.ShapeDtypeStruct((N, L, L), weights_dtype))

    scratch_shapes = [
        pltpu.VMEM((batch_block, L, E), compute_dtype),      # q
        pltpu.VMEM((batch_block, L, E), compute_dtype),      # k
        pltpu.VMEM((batch_block, L, E), compute_dtype),      # v
        pltpu.VMEM((L, E), slab_dtype),                      # per-head output slab
    ]

    kernel = functools.partial(_msa_kernel, num_heads=num_heads,
                               compute_dtype=compute_dtype, need_weights=need_weights)

    def run(resident_weights):
        x_spec = pl.BlockSpec((batch_block, L, E), lambda n: (n, 0, 0))
        if resident_weights:
            # Constant weights/biases live whole in VMEM for the entire grid: no per-step
            # double-buffering (saves 4*E*E*itemsize bytes of VMEM vs blocked specs).
            w_specs = [pl.BlockSpec(memory_space=pltpu.MemorySpace.VMEM)
                       for _ in range(8)]
        else:
            w_specs = [pl.BlockSpec(shp, lambda n: (0, 0))
                       for shp in ((E, E), (1, E)) * 4]
        out_specs = [pl.BlockSpec((batch_block, L, E), lambda n: (n, 0, 0))]
        if need_weights:
            out_specs.append(pl.BlockSpec((batch_block, L, L), lambda n: (n, 0, 0)))
        return pl.pallas_call(
            kernel,
            out_shape=out_shape,
            grid_spec=pltpu.PrefetchScalarGridSpec(
                num_scalar_prefetch=0,
                grid=grid,
                in_specs=[x_spec] + w_specs,
                out_specs=out_specs,
                scratch_shapes=scratch_shapes),
            compiler_params=pltpu.CompilerParams(
                dimension_semantics=("parallel",),
                vmem_limit_bytes=int(max(budget, 32 << 20))),
        )(x_nle, wqt, bq, wkt, bk, wvt, bv, wot, bo)

    try:
        results = run(resident_weights=True)
    except Exception:
        # Fallback: blocked (double-buffered) weight specs — identical kernel & numerics.
        results = run(resident_weights=False)

    if need_weights:
        out_nle, attn = results
    else:
        out_nle = results[0] if isinstance(results, (list, tuple)) else results
        attn = None

    # Back to the module's seq-first layout.
    return jnp.transpose(out_nle, (1, 0, 2)), attn


# --------------------------------------------------------------------------------------
# Pure-JAX reference, params, test
# --------------------------------------------------------------------------------------
def reference_forward(x, params, num_heads):
    """Pure-JAX reference mirroring torch semantics (eval mode, unfused weights)."""
    L, N, E = x.shape
    H, Dh = num_heads, E // num_heads
    Q = x @ params["wq"].T + params["bq"][0]
    K = x @ params["wk"].T + params["bk"][0]
    V = x @ params["wv"].T + params["bv"][0]
    q = Q @ params["wiq"].T + params["biq"][0]
    k = K @ params["wik"].T + params["bik"][0]
    v = V @ params["wiv"].T + params["biv"][0]
    to_heads = lambda t: jnp.transpose(t.reshape(L, N, H, Dh), (1, 2, 0, 3))   # (N,H,L,Dh)
    qh, kh, vh = to_heads(q), to_heads(k), to_heads(v)
    s = jnp.einsum("nhld,nhmd->nhlm", qh, kh) / math.sqrt(Dh)
    p = jax.nn.softmax(s, axis=-1)
    o = jnp.einsum("nhlm,nhmd->nhld", p, vh)
    o = jnp.transpose(o, (2, 0, 1, 3)).reshape(L, N, E)
    out = o @ params["wo"].T + params["bo"][0]
    return out, p.mean(axis=1)


def init_params(key, in_dim):
    names = ["wq", "bq", "wk", "bk", "wv", "bv",
             "wiq", "biq", "wik", "bik", "wiv", "biv", "wo", "bo"]
    keys = jax.random.split(key, len(names))
    bound = 1.0 / math.sqrt(in_dim)
    params = {}
    for name, k in zip(names, keys):
        shape = (in_dim, in_dim) if name.startswith("w") else (1, in_dim)
        params[name] = jax.random.uniform(
            k, shape, jnp.float32, minval=-bound, maxval=bound)
    return params


if __name__ == "__main__":
    in_dim, num_heads = 32, 4       # head_dim = 8
    seq_len, batch = 8, 2

    key = jax.random.PRNGKey(0)
    kx, kp = jax.random.split(key)
    x = jax.random.normal(kx, (seq_len, batch, in_dim), jnp.float32)   # (L, N, E)
    params = init_params(kp, in_dim)

    ref_out, ref_attn = reference_forward(x, params, num_heads)
    ref_out, ref_attn = jax.block_until_ready((ref_out, ref_attn))

    # Full-precision path: tight check against the pure-JAX reference.
    out32, attn32 = multi_self_attention(x, params, num_heads, compute_dtype=jnp.float32)
    out32, attn32 = jax.block_until_ready((out32, attn32))
    np.testing.assert_allclose(np.asarray(out32), np.asarray(ref_out), atol=1e-4, rtol=1e-4)
    np.testing.assert_allclose(np.asarray(attn32), np.asarray(ref_attn), atol=1e-4, rtol=1e-4)

    # Default performance path: bf16 MXU operands, f32 accumulation.
    out_bf, attn_bf = multi_self_attention(x, params, num_heads)
    out_bf, attn_bf = jax.block_until_ready((out_bf, attn_bf))
    np.testing.assert_allclose(np.asarray(out_bf), np.asarray(ref_out), atol=3e-2, rtol=3e-2)
    np.testing.assert_allclose(np.asarray(attn_bf), np.asarray(ref_attn), atol=3e-2, rtol=3e-2)

    # need_weights=False fast path (skips the (N, L, L) attention-weights writeback).
    out_nw, none_w = multi_self_attention(x, params, num_heads, need_weights=False)
    out_nw = jax.block_until_ready(out_nw)
    assert none_w is None
    np.testing.assert_allclose(np.asarray(out_nw), np.asarray(ref_out), atol=3e-2, rtol=3e-2)

    print("KERNEL_OK")
</pallas_src>

<mosaic_0001>
module attributes {stable_mosaic.version = 11 : i64} {
  func.func @_msa_kernel(%arg0: i32, %arg1: memref<2x8x32xf32, #tpu.memory_space<vmem>>, %arg2: memref<32x32xf32, #tpu.memory_space<vmem>>, %arg3: memref<1x32xf32, #tpu.memory_space<vmem>>, %arg4: memref<32x32xf32, #tpu.memory_space<vmem>>, %arg5: memref<1x32xf32, #tpu.memory_space<vmem>>, %arg6: memref<32x32xf32, #tpu.memory_space<vmem>>, %arg7: memref<1x32xf32, #tpu.memory_space<vmem>>, %arg8: memref<32x32xf32, #tpu.memory_space<vmem>>, %arg9: memref<1x32xf32, #tpu.memory_space<vmem>>, %arg10: memref<2x8x32xf32, #tpu.memory_space<vmem>>, %arg11: memref<2x8x8xf32, #tpu.memory_space<vmem>>, %arg12: memref<2x8x32xf32, #tpu.memory_space<vmem>>, %arg13: memref<2x8x32xf32, #tpu.memory_space<vmem>>, %arg14: memref<2x8x32xf32, #tpu.memory_space<vmem>>, %arg15: memref<8x32xf32, #tpu.memory_space<vmem>>) attributes {dimension_semantics = [#tpu.dimension_semantics<parallel>], iteration_bounds = array<i64: 1>, scalar_prefetch = 0 : i64, scratch_operands = 4 : i64, tpu.core_type = #tpu.core_type<tc>, window_params = [{transform_indices = @transform_0, window_bounds = array<i64: 2, 8, 32>}, {pipeline_mode = #tpu.pipeline_mode<synchronous>, transform_indices = @transform_1, window_bounds = array<i64: 32, 32>}, {pipeline_mode = #tpu.pipeline_mode<synchronous>, transform_indices = @transform_2, window_bounds = array<i64: 1, 32>}, {pipeline_mode = #tpu.pipeline_mode<synchronous>, transform_indices = @transform_3, window_bounds = array<i64: 32, 32>}, {pipeline_mode = #tpu.pipeline_mode<synchronous>, transform_indices = @transform_4, window_bounds = array<i64: 1, 32>}, {pipeline_mode = #tpu.pipeline_mode<synchronous>, transform_indices = @transform_5, window_bounds = array<i64: 32, 32>}, {pipeline_mode = #tpu.pipeline_mode<synchronous>, transform_indices = @transform_6, window_bounds = array<i64: 1, 32>}, {pipeline_mode = #tpu.pipeline_mode<synchronous>, transform_indices = @transform_7, window_bounds = array<i64: 32, 32>}, {pipeline_mode = #tpu.pipeline_mode<synchronous>, transform_indices = @transform_8, window_bounds = array<i64: 1, 32>}, {transform_indices = @transform_9, window_bounds = array<i64: 2, 8, 32>}, {transform_indices = @transform_10, window_bounds = array<i64: 2, 8, 8>}]} {
    %c0 = arith.constant 0 : index
    %c0_0 = arith.constant 0 : index
    %c0_1 = arith.constant 0 : index
    %0 = vector.load %arg1[%c0, %c0_0, %c0_1] : memref<2x8x32xf32, #tpu.memory_space<vmem>>, vector<2x8x32xf32>
    %1 = vector.shape_cast %0 : vector<2x8x32xf32> to vector<16x32xf32>
    %c0_2 = arith.constant 0 : index
    %c0_3 = arith.constant 0 : index
    %2 = vector.load %arg2[%c0_2, %c0_3] : memref<32x32xf32, #tpu.memory_space<vmem>>, vector<32x32xf32>
    %cst = arith.constant dense<0.000000e+00> : vector<16x32xf32>
    %3 = tpu.matmul %1, %2, %cst {dimension_numbers = #tpu.dot_dimension_numbers<[1], [0], [0], [1], [0, 0, 1, 1], [], []>} : vector<16x32xf32>, vector<32x32xf32>, vector<16x32xf32> -> vector<16x32xf32>
    %c0_4 = arith.constant 0 : index
    %c0_5 = arith.constant 0 : index
    %4 = vector.load %arg3[%c0_4, %c0_5] : memref<1x32xf32, #tpu.memory_space<vmem>>, vector<1x32xf32>
    %5 = vector.broadcast %4 : vector<1x32xf32> to vector<16x32xf32>
    %6 = arith.addf %3, %5 : vector<16x32xf32>
    %7 = vector.shape_cast %6 : vector<16x32xf32> to vector<2x8x32xf32>
    %c0_6 = arith.constant 0 : index
    %c0_7 = arith.constant 0 : index
    %c0_8 = arith.constant 0 : index
    %8 = vector.load %arg12[%c0_6, %c0_7, %c0_8] : memref<2x8x32xf32, #tpu.memory_space<vmem>>, vector<2x8x32xf32>
    tpu.vector_store %arg12[%c0_6, %c0_7, %c0_8], %7 {strides = array<i32>} : memref<2x8x32xf32, #tpu.memory_space<vmem>>, vector<2x8x32xf32>,
    %c0_9 = arith.constant 0 : index
    %c0_10 = arith.constant 0 : index
    %9 = vector.load %arg4[%c0_9, %c0_10] : memref<32x32xf32, #tpu.memory_space<vmem>>, vector<32x32xf32>
    %cst_11 = arith.constant dense<0.000000e+00> : vector<16x32xf32>
    %10 = tpu.matmul %1, %9, %cst_11 {dimension_numbers = #tpu.dot_dimension_numbers<[1], [0], [0], [1], [0, 0, 1, 1], [], []>} : vector<16x32xf32>, vector<32x32xf32>, vector<16x32xf32> -> vector<16x32xf32>
    %c0_12 = arith.constant 0 : index
    %c0_13 = arith.constant 0 : index
    %11 = vector.load %arg5[%c0_12, %c0_13] : memref<1x32xf32, #tpu.memory_space<vmem>>, vector<1x32xf32>
    %12 = vector.broadcast %11 : vector<1x32xf32> to vector<16x32xf32>
    %13 = arith.addf %10, %12 : vector<16x32xf32>
    %14 = vector.shape_cast %13 : vector<16x32xf32> to vector<2x8x32xf32>
    %c0_14 = arith.constant 0 : index
    %c0_15 = arith.constant 0 : index
    %c0_16 = arith.constant 0 : index
    %15 = vector.load %arg13[%c0_14, %c0_15, %c0_16] : memref<2x8x32xf32, #tpu.memory_space<vmem>>, vector<2x8x32xf32>
    tpu.vector_store %arg13[%c0_14, %c0_15, %c0_16], %14 {strides = array<i32>} : memref<2x8x32xf32, #tpu.memory_space<vmem>>, vector<2x8x32xf32>,
    %c0_17 = arith.constant 0 : index
    %c0_18 = arith.constant 0 : index
    %16 = vector.load %arg6[%c0_17, %c0_18] : memref<32x32xf32, #tpu.memory_space<vmem>>, vector<32x32xf32>
    %cst_19 = arith.constant dense<0.000000e+00> : vector<16x32xf32>
    %17 = tpu.matmul %1, %16, %cst_19 {dimension_numbers = #tpu.dot_dimension_numbers<[1], [0], [0], [1], [0, 0, 1, 1], [], []>} : vector<16x32xf32>, vector<32x32xf32>, vector<16x32xf32> -> vector<16x32xf32>
    %c0_20 = arith.constant 0 : index
    %c0_21 = arith.constant 0 : index
    %18 = vector.load %arg7[%c0_20, %c0_21] : memref<1x32xf32, #tpu.memory_space<vmem>>, vector<1x32xf32>
    %19 = vector.broadcast %18 : vector<1x32xf32> to vector<16x32xf32>
    %20 = arith.addf %17, %19 : vector<16x32xf32>
    %21 = vector.shape_cast %20 : vector<16x32xf32> to vector<2x8x32xf32>
    %c0_22 = arith.constant 0 : index
    %c0_23 = arith.constant 0 : index
    %c0_24 = arith.constant 0 : index
    %22 = vector.load %arg14[%c0_22, %c0_23, %c0_24] : memref<2x8x32xf32, #tpu.memory_space<vmem>>, vector<2x8x32xf32>
    tpu.vector_store %arg14[%c0_22, %c0_23, %c0_24], %21 {strides = array<i32>} : memref<2x8x32xf32, #tpu.memory_space<vmem>>, vector<2x8x32xf32>,
    %c0_i32 = arith.constant 0 : i32
    %c2_i32 = arith.constant 2 : i32
    %23 = arith.addi %c0_i32, %c2_i32 : i32
    %c1_i32 = arith.constant 1 : i32
    scf.for %arg16 = %c0_i32 to %23 step %c1_i32  : i32 {
      %24 = arith.index_cast %arg16 : i32 to index
      %c0_26 = arith.constant 0 : index
      %c0_27 = arith.constant 0 : index
      %25 = vector.load %arg12[%24, %c0_26, %c0_27] : memref<2x8x32xf32, #tpu.memory_space<vmem>>, vector<1x8x32xf32>
      %26 = vector.shape_cast %25 : vector<1x8x32xf32> to vector<8x32xf32>
      %27 = arith.index_cast %arg16 : i32 to index
      %c0_28 = arith.constant 0 : index
      %c0_29 = arith.constant 0 : index
      %28 = vector.load %arg13[%27, %c0_28, %c0_29] : memref<2x8x32xf32, #tpu.memory_space<vmem>>, vector<1x8x32xf32>
      %29 = vector.shape_cast %28 : vector<1x8x32xf32> to vector<8x32xf32>
      %30 = arith.index_cast %arg16 : i32 to index
      %c0_30 = arith.constant 0 : index
      %c0_31 = arith.constant 0 : index
      %31 = vector.load %arg14[%30, %c0_30, %c0_31] : memref<2x8x32xf32, #tpu.memory_space<vmem>>, vector<1x8x32xf32>
      %32 = vector.shape_cast %31 : vector<1x8x32xf32> to vector<8x32xf32>
      %33 = vector.extract_strided_slice %26 {offsets = [0, 0], sizes = [8, 8], strides = [1, 1]} : vector<8x32xf32> to vector<8x8xf32>
      %34 = vector.extract_strided_slice %29 {offsets = [0, 0], sizes = [8, 8], strides = [1, 1]} : vector<8x32xf32> to vector<8x8xf32>
      %35 = vector.extract_strided_slice %32 {offsets = [0, 0], sizes = [8, 8], strides = [1, 1]} : vector<8x32xf32> to vector<8x8xf32>
      %cst_32 = arith.constant dense<0.000000e+00> : vector<8x8xf32>
      %36 = tpu.matmul %33, %34, %cst_32 {dimension_numbers = #tpu.dot_dimension_numbers<[1], [1], [0], [0], [0, 0, 1, 0], [], []>} : vector<8x8xf32>, vector<8x8xf32>, vector<8x8xf32> -> vector<8x8xf32>
      %cst_33 = arith.constant dense<0xFF800000> : vector<8xf32>
      %37 = vector.multi_reduction <maximumf>, %36, %cst_33 [1] : vector<8x8xf32> to vector<8xf32>
      %38 = vector.shape_cast %37 : vector<8xf32> to vector<8x1xf32>
      %39 = vector.broadcast %38 : vector<8x1xf32> to vector<8x8xf32>
      %40 = arith.subf %36, %39 : vector<8x8xf32>
      %41 = math.exp %40 : vector<8x8xf32>
      %cst_34 = arith.constant dense<0.000000e+00> : vector<8xf32>
      %42 = vector.multi_reduction <add>, %41, %cst_34 [1] : vector<8x8xf32> to vector<8xf32>
      %43 = vector.shape_cast %42 : vector<8xf32> to vector<8x1xf32>
      %44 = tpu.reciprocal %43 : vector<8x1xf32> -> vector<8x1xf32>
      %45 = vector.broadcast %44 : vector<8x1xf32> to vector<8x8xf32>
      %46 = arith.mulf %41, %45 : vector<8x8xf32>
      %cst_35 = arith.constant 2.500000e-01 : f32
      %47 = vector.broadcast %cst_35 : f32 to vector<8x8xf32>
      %48 = arith.mulf %46, %47 : vector<8x8xf32>
      %49 = arith.index_cast %arg16 : i32 to index
      %c0_36 = arith.constant 0 : index
      %c0_37 = arith.constant 0 : index
      %50 = vector.load %arg11[%49, %c0_36, %c0_37] : memref<2x8x8xf32, #tpu.memory_space<vmem>>, vector<1x8x8xf32>
      %51 = vector.shape_cast %50 : vector<1x8x8xf32> to vector<8x8xf32>
      %52 = vector.shape_cast %48 : vector<8x8xf32> to vector<1x8x8xf32>
      tpu.vector_store %arg11[%49, %c0_36, %c0_37], %52 {strides = array<i32>} : memref<2x8x8xf32, #tpu.memory_space<vmem>>, vector<1x8x8xf32>,
      %cst_38 = arith.constant dense<0.000000e+00> : vector<8x8xf32>
      %53 = tpu.matmul %46, %35, %cst_38 {dimension_numbers = #tpu.dot_dimension_numbers<[1], [0], [0], [1], [0, 0, 1, 1], [], []>} : vector<8x8xf32>, vector<8x8xf32>, vector<8x8xf32> -> vector<8x8xf32>
      %c0_39 = arith.constant 0 : index
      %c0_40 = arith.constant 0 : index
      %54 = vector.load %arg15[%c0_39, %c0_40] : memref<8x32xf32, #tpu.memory_space<vmem>>, vector<8x8xf32>
      tpu.vector_store %arg15[%c0_39, %c0_40], %53 {strides = array<i32>} : memref<8x32xf32, #tpu.memory_space<vmem>>, vector<8x8xf32>,
      %55 = vector.extract_strided_slice %26 {offsets = [0, 8], sizes = [8, 8], strides = [1, 1]} : vector<8x32xf32> to vector<8x8xf32>
      %56 = vector.extract_strided_slice %29 {offsets = [0, 8], sizes = [8, 8], strides = [1, 1]} : vector<8x32xf32> to vector<8x8xf32>
      %57 = vector.extract_strided_slice %32 {offsets = [0, 8], sizes = [8, 8], strides = [1, 1]} : vector<8x32xf32> to vector<8x8xf32>
      %cst_41 = arith.constant dense<0.000000e+00> : vector<8x8xf32>
      %58 = tpu.matmul %55, %56, %cst_41 {dimension_numbers = #tpu.dot_dimension_numbers<[1], [1], [0], [0], [0, 0, 1, 0], [], []>} : vector<8x8xf32>, vector<8x8xf32>, vector<8x8xf32> -> vector<8x8xf32>
      %cst_42 = arith.constant dense<0xFF800000> : vector<8xf32>
      %59 = vector.multi_reduction <maximumf>, %58, %cst_42 [1] : vector<8x8xf32> to vector<8xf32>
      %60 = vector.shape_cast %59 : vector<8xf32> to vector<8x1xf32>
      %61 = vector.broadcast %60 : vector<8x1xf32> to vector<8x8xf32>
      %62 = arith.subf %58, %61 : vector<8x8xf32>
      %63 = math.exp %62 : vector<8x8xf32>
      %cst_43 = arith.constant dense<0.000000e+00> : vector<8xf32>
      %64 = vector.multi_reduction <add>, %63, %cst_43 [1] : vector<8x8xf32> to vector<8xf32>
      %65 = vector.shape_cast %64 : vector<8xf32> to vector<8x1xf32>
      %66 = tpu.reciprocal %65 : vector<8x1xf32> -> vector<8x1xf32>
      %67 = vector.broadcast %66 : vector<8x1xf32> to vector<8x8xf32>
      %68 = arith.mulf %63, %67 : vector<8x8xf32>
      %cst_44 = arith.constant 2.500000e-01 : f32
      %69 = vector.broadcast %cst_44 : f32 to vector<8x8xf32>
      %70 = arith.mulf %68, %69 : vector<8x8xf32>
      %71 = arith.index_cast %arg16 : i32 to index
      %c0_45 = arith.constant 0 : index
      %c0_46 = arith.constant 0 : index
      %72 = vector.load %arg11[%71, %c0_45, %c0_46] : memref<2x8x8xf32, #tpu.memory_space<vmem>>, vector<1x8x8xf32>
      %73 = vector.shape_cast %72 : vector<1x8x8xf32> to vector<8x8xf32>
      %74 = arith.addf %73, %70 : vector<8x8xf32>
      %75 = arith.index_cast %arg16 : i32 to index
      %c0_47 = arith.constant 0 : index
      %c0_48 = arith.constant 0 : index
      %76 = vector.load %arg11[%75, %c0_47, %c0_48] : memref<2x8x8xf32, #tpu.memory_space<vmem>>, vector<1x8x8xf32>
      %77 = vector.shape_cast %76 : vector<1x8x8xf32> to vector<8x8xf32>
      %78 = vector.shape_cast %74 : vector<8x8xf32> to vector<1x8x8xf32>
      tpu.vector_store %arg11[%75, %c0_47, %c0_48], %78 {strides = array<i32>} : memref<2x8x8xf32, #tpu.memory_space<vmem>>, vector<1x8x8xf32>,
      %cst_49 = arith.constant dense<0.000000e+00> : vector<8x8xf32>
      %79 = tpu.matmul %68, %57, %cst_49 {dimension_numbers = #tpu.dot_dimension_numbers<[1], [0], [0], [1], [0, 0, 1, 1], [], []>} : vector<8x8xf32>, vector<8x8xf32>, vector<8x8xf32> -> vector<8x8xf32>
      %c0_50 = arith.constant 0 : index
      %c8 = arith.constant 8 : index
      %80 = vector.load %arg15[%c0_50, %c8] : memref<8x32xf32, #tpu.memory_space<vmem>>, vector<8x8xf32>
      tpu.vector_store %arg15[%c0_50, %c8], %79 {strides = array<i32>} : memref<8x32xf32, #tpu.memory_space<vmem>>, vector<8x8xf32>,
      %81 = vector.extract_strided_slice %26 {offsets = [0, 16], sizes = [8, 8], strides = [1, 1]} : vector<8x32xf32> to vector<8x8xf32>
      %82 = vector.extract_strided_slice %29 {offsets = [0, 16], sizes = [8, 8], strides = [1, 1]} : vector<8x32xf32> to vector<8x8xf32>
      %83 = vector.extract_strided_slice %32 {offsets = [0, 16], sizes = [8, 8], strides = [1, 1]} : vector<8x32xf32> to vector<8x8xf32>
      %cst_51 = arith.constant dense<0.000000e+00> : vector<8x8xf32>
      %84 = tpu.matmul %81, %82, %cst_51 {dimension_numbers = #tpu.dot_dimension_numbers<[1], [1], [0], [0], [0, 0, 1, 0], [], []>} : vector<8x8xf32>, vector<8x8xf32>, vector<8x8xf32> -> vector<8x8xf32>
      %cst_52 = arith.constant dense<0xFF800000> : vector<8xf32>
      %85 = vector.multi_reduction <maximumf>, %84, %cst_52 [1] : vector<8x8xf32> to vector<8xf32>
      %86 = vector.shape_cast %85 : vector<8xf32> to vector<8x1xf32>
      %87 = vector.broadcast %86 : vector<8x1xf32> to vector<8x8xf32>
      %88 = arith.subf %84, %87 : vector<8x8xf32>
      %89 = math.exp %88 : vector<8x8xf32>
      %cst_53 = arith.constant dense<0.000000e+00> : vector<8xf32>
      %90 = vector.multi_reduction <add>, %89, %cst_53 [1] : vector<8x8xf32> to vector<8xf32>
      %91 = vector.shape_cast %90 : vector<8xf32> to vector<8x1xf32>
      %92 = tpu.reciprocal %91 : vector<8x1xf32> -> vector<8x1xf32>
      %93 = vector.broadcast %92 : vector<8x1xf32> to vector<8x8xf32>
      %94 = arith.mulf %89, %93 : vector<8x8xf32>
      %cst_54 = arith.constant 2.500000e-01 : f32
      %95 = vector.broadcast %cst_54 : f32 to vector<8x8xf32>
      %96 = arith.mulf %94, %95 : vector<8x8xf32>
      %97 = arith.index_cast %arg16 : i32 to index
      %c0_55 = arith.constant 0 : index
      %c0_56 = arith.constant 0 : index
      %98 = vector.load %arg11[%97, %c0_55, %c0_56] : memref<2x8x8xf32, #tpu.memory_space<vmem>>, vector<1x8x8xf32>
      %99 = vector.shape_cast %98 : vector<1x8x8xf32> to vector<8x8xf32>
      %100 = arith.addf %99, %96 : vector<8x8xf32>
      %101 = arith.index_cast %arg16 : i32 to index
      %c0_57 = arith.constant 0 : index
      %c0_58 = arith.constant 0 : index
      %102 = vector.load %arg11[%101, %c0_57, %c0_58] : memref<2x8x8xf32, #tpu.memory_space<vmem>>, vector<1x8x8xf32>
      %103 = vector.shape_cast %102 : vector<1x8x8xf32> to vector<8x8xf32>
      %104 = vector.shape_cast %100 : vector<8x8xf32> to vector<1x8x8xf32>
      tpu.vector_store %arg11[%101, %c0_57, %c0_58], %104 {strides = array<i32>} : memref<2x8x8xf32, #tpu.memory_space<vmem>>, vector<1x8x8xf32>,
      %cst_59 = arith.constant dense<0.000000e+00> : vector<8x8xf32>
      %105 = tpu.matmul %94, %83, %cst_59 {dimension_numbers = #tpu.dot_dimension_numbers<[1], [0], [0], [1], [0, 0, 1, 1], [], []>} : vector<8x8xf32>, vector<8x8xf32>, vector<8x8xf32> -> vector<8x8xf32>
      %c0_60 = arith.constant 0 : index
      %c16 = arith.constant 16 : index
      %106 = vector.load %arg15[%c0_60, %c16] : memref<8x32xf32, #tpu.memory_space<vmem>>, vector<8x8xf32>
      tpu.vector_store %arg15[%c0_60, %c16], %105 {strides = array<i32>} : memref<8x32xf32, #tpu.memory_space<vmem>>, vector<8x8xf32>,
      %107 = vector.extract_strided_slice %26 {offsets = [0, 24], sizes = [8, 8], strides = [1, 1]} : vector<8x32xf32> to vector<8x8xf32>
      %108 = vector.extract_strided_slice %29 {offsets = [0, 24], sizes = [8, 8], strides = [1, 1]} : vector<8x32xf32> to vector<8x8xf32>
      %109 = vector.extract_strided_slice %32 {offsets = [0, 24], sizes = [8, 8], strides = [1, 1]} : vector<8x32xf32> to vector<8x8xf32>
      %cst_61 = arith.constant dense<0.000000e+00> : vector<8x8xf32>
      %110 = tpu.matmul %107, %108, %cst_61 {dimension_numbers = #tpu.dot_dimension_numbers<[1], [1], [0], [0], [0, 0, 1, 0], [], []>} : vector<8x8xf32>, vector<8x8xf32>, vector<8x8xf32> -> vector<8x8xf32>
      %cst_62 = arith.constant dense<0xFF800000> : vector<8xf32>
      %111 = vector.multi_reduction <maximumf>, %110, %cst_62 [1] : vector<8x8xf32> to vector<8xf32>
      %112 = vector.shape_cast %111 : vector<8xf32> to vector<8x1xf32>
      %113 = vector.broadcast %112 : vector<8x1xf32> to vector<8x8xf32>
      %114 = arith.subf %110, %113 : vector<8x8xf32>
      %115 = math.exp %114 : vector<8x8xf32>
      %cst_63 = arith.constant dense<0.000000e+00> : vector<8xf32>
      %116 = vector.multi_reduction <add>, %115, %cst_63 [1] : vector<8x8xf32> to vector<8xf32>
      %117 = vector.shape_cast %116 : vector<8xf32> to vector<8x1xf32>
      %118 = tpu.reciprocal %117 : vector<8x1xf32> -> vector<8x1xf32>
      %119 = vector.broadcast %118 : vector<8x1xf32> to vector<8x8xf32>
      %120 = arith.mulf %115, %119 : vector<8x8xf32>
      %cst_64 = arith.constant 2.500000e-01 : f32
      %121 = vector.broadcast %cst_64 : f32 to vector<8x8xf32>
      %122 = arith.mulf %120, %121 : vector<8x8xf32>
      %123 = arith.index_cast %arg16 : i32 to index
      %c0_65 = arith.constant 0 : index
      %c0_66 = arith.constant 0 : index
      %124 = vector.load %arg11[%123, %c0_65, %c0_66] : memref<2x8x8xf32, #tpu.memory_space<vmem>>, vector<1x8x8xf32>
      %125 = vector.shape_cast %124 : vector<1x8x8xf32> to vector<8x8xf32>
      %126 = arith.addf %125, %122 : vector<8x8xf32>
      %127 = arith.index_cast %arg16 : i32 to index
      %c0_67 = arith.constant 0 : index
      %c0_68 = arith.constant 0 : index
      %128 = vector.load %arg11[%127, %c0_67, %c0_68] : memref<2x8x8xf32, #tpu.memory_space<vmem>>, vector<1x8x8xf32>
      %129 = vector.shape_cast %128 : vector<1x8x8xf32> to vector<8x8xf32>
      %130 = vector.shape_cast %126 : vector<8x8xf32> to vector<1x8x8xf32>
      tpu.vector_store %arg11[%127, %c0_67, %c0_68], %130 {strides = array<i32>} : memref<2x8x8xf32, #tpu.memory_space<vmem>>, vector<1x8x8xf32>,
      %cst_69 = arith.constant dense<0.000000e+00> : vector<8x8xf32>
      %131 = tpu.matmul %120, %109, %cst_69 {dimension_numbers = #tpu.dot_dimension_numbers<[1], [0], [0], [1], [0, 0, 1, 1], [], []>} : vector<8x8xf32>, vector<8x8xf32>, vector<8x8xf32> -> vector<8x8xf32>
      %c0_70 = arith.constant 0 : index
      %c24 = arith.constant 24 : index
      %132 = vector.load %arg15[%c0_70, %c24] : memref<8x32xf32, #tpu.memory_space<vmem>>, vector<8x8xf32>
      tpu.vector_store %arg15[%c0_70, %c24], %131 {strides = array<i32>} : memref<8x32xf32, #tpu.memory_space<vmem>>, vector<8x8xf32>,
      %c0_71 = arith.constant 0 : index
      %c0_72 = arith.constant 0 : index
      %133 = vector.load %arg15[%c0_71, %c0_72] : memref<8x32xf32, #tpu.memory_space<vmem>>, vector<8x32xf32>
      %c0_73 = arith.constant 0 : index
      %c0_74 = arith.constant 0 : index
      %134 = vector.load %arg8[%c0_73, %c0_74] : memref<32x32xf32, #tpu.memory_space<vmem>>, vector<32x32xf32>
      %cst_75 = arith.constant dense<0.000000e+00> : vector<8x32xf32>
      %135 = tpu.matmul %133, %134, %cst_75 {dimension_numbers = #tpu.dot_dimension_numbers<[1], [0], [0], [1], [0, 0, 1, 1], [], []>} : vector<8x32xf32>, vector<32x32xf32>, vector<8x32xf32> -> vector<8x32xf32>
      %c0_76 = arith.constant 0 : index
      %c0_77 = arith.constant 0 : index
      %136 = vector.load %arg9[%c0_76, %c0_77] : memref<1x32xf32, #tpu.memory_space<vmem>>, vector<1x32xf32>
      %137 = vector.broadcast %136 : vector<1x32xf32> to vector<8x32xf32>
      %138 = arith.addf %135, %137 : vector<8x32xf32>
      %139 = arith.index_cast %arg16 : i32 to index
      %c0_78 = arith.constant 0 : index
      %c0_79 = arith.constant 0 : index
      %140 = vector.load %arg10[%139, %c0_78, %c0_79] : memref<2x8x32xf32, #tpu.memory_space<vmem>>, vector<1x8x32xf32>
      %141 = vector.shape_cast %140 : vector<1x8x32xf32> to vector<8x32xf32>
      %142 = vector.shape_cast %138 : vector<8x32xf32> to vector<1x8x32xf32>
      tpu.vector_store %arg10[%139, %c0_78, %c0_79], %142 {strides = array<i32>} : memref<2x8x32xf32, #tpu.memory_space<vmem>>, vector<1x8x32xf32>,
    }
    %c2_i32_25 = arith.constant 2 : i32
    return
  }
  func.func @transform_0(%arg0: i32) -> (i32, i32, i32) {
    %c0_i32 = arith.constant 0 : i32
    %c0_i32_0 = arith.constant 0 : i32
    %c0_i32_1 = arith.constant 0 : i32
    return %arg0, %c0_i32, %c0_i32_0 : i32, i32, i32
  }
  func.func @transform_1(%arg0: i32) -> (i32, i32) {
    %c0_i32 = arith.constant 0 : i32
    %c0_i32_0 = arith.constant 0 : i32
    %c0_i32_1 = arith.constant 0 : i32
    return %c0_i32, %c0_i32_0 : i32, i32
  }
  func.func @transform_2(%arg0: i32) -> (i32, i32) {
    %c0_i32 = arith.constant 0 : i32
    %c0_i32_0 = arith.constant 0 : i32
    %c0_i32_1 = arith.constant 0 : i32
    return %c0_i32, %c0_i32_0 : i32, i32
  }
  func.func @transform_3(%arg0: i32) -> (i32, i32) {
    %c0_i32 = arith.constant 0 : i32
    %c0_i32_0 = arith.constant 0 : i32
    %c0_i32_1 = arith.constant 0 : i32
    return %c0_i32, %c0_i32_0 : i32, i32
  }
  func.func @transform_4(%arg0: i32) -> (i32, i32) {
    %c0_i32 = arith.constant 0 : i32
    %c0_i32_0 = arith.constant 0 : i32
    %c0_i32_1 = arith.constant 0 : i32
    return %c0_i32, %c0_i32_0 : i32, i32
  }
  func.func @transform_5(%arg0: i32) -> (i32, i32) {
    %c0_i32 = arith.constant 0 : i32
    %c0_i32_0 = arith.constant 0 : i32
    %c0_i32_1 = arith.constant 0 : i32
    return %c0_i32, %c0_i32_0 : i32, i32
  }
  func.func @transform_6(%arg0: i32) -> (i32, i32) {
    %c0_i32 = arith.constant 0 : i32
    %c0_i32_0 = arith.constant 0 : i32
    %c0_i32_1 = arith.constant 0 : i32
    return %c0_i32, %c0_i32_0 : i32, i32
  }
  func.func @transform_7(%arg0: i32) -> (i32, i32) {
    %c0_i32 = arith.constant 0 : i32
    %c0_i32_0 = arith.constant 0 : i32
    %c0_i32_1 = arith.constant 0 : i32
    return %c0_i32, %c0_i32_0 : i32, i32
  }
  func.func @transform_8(%arg0: i32) -> (i32, i32) {
    %c0_i32 = arith.constant 0 : i32
    %c0_i32_0 = arith.constant 0 : i32
    %c0_i32_1 = arith.constant 0 : i32
    return %c0_i32, %c0_i32_0 : i32, i32
  }
  func.func @transform_9(%arg0: i32) -> (i32, i32, i32) {
    %c0_i32 = arith.constant 0 : i32
    %c0_i32_0 = arith.constant 0 : i32
    %c0_i32_1 = arith.constant 0 : i32
    return %arg0, %c0_i32, %c0_i32_0 : i32, i32, i32
  }
  func.func @transform_10(%arg0: i32) -> (i32, i32, i32) {
    %c0_i32 = arith.constant 0 : i32
    %c0_i32_0 = arith.constant 0 : i32
    %c0_i32_1 = arith.constant 0 : i32
    return %arg0, %c0_i32, %c0_i32_0 : i32, i32, i32
  }
}

module attributes {stable_mosaic.version = 11 : i64} {
  func.func @_msa_kernel(%arg0: i32, %arg1: memref<2x8x32xf32, #tpu.memory_space<vmem>>, %arg2: memref<32x32xf32, #tpu.memory_space<vmem>>, %arg3: memref<1x32xf32, #tpu.memory_space<vmem>>, %arg4: memref<32x32xf32, #tpu.memory_space<vmem>>, %arg5: memref<1x32xf32, #tpu.memory_space<vmem>>, %arg6: memref<32x32xf32, #tpu.memory_space<vmem>>, %arg7: memref<1x32xf32, #tpu.memory_space<vmem>>, %arg8: memref<32x32xf32, #tpu.memory_space<vmem>>, %arg9: memref<1x32xf32, #tpu.memory_space<vmem>>, %arg10: memref<2x8x32xf32, #tpu.memory_space<vmem>>, %arg11: memref<2x8x8xf32, #tpu.memory_space<vmem>>, %arg12: memref<2x8x32xf32, #tpu.memory_space<vmem>>, %arg13: memref<2x8x32xf32, #tpu.memory_space<vmem>>, %arg14: memref<2x8x32xf32, #tpu.memory_space<vmem>>, %arg15: memref<8x32xf32, #tpu.memory_space<vmem>>) attributes {dimension_semantics = [#tpu.dimension_semantics<parallel>], iteration_bounds = array<i64: 1>, scalar_prefetch = 0 : i64, scratch_operands = 4 : i64, tpu.core_type = #tpu.core_type<tc>, window_params = [{transform_indices = @transform_0, window_bounds = array<i64: 2, 8, 32>}, {pipeline_mode = #tpu.pipeline_mode<synchronous>, transform_indices = @transform_1, window_bounds = array<i64: 32, 32>}, {pipeline_mode = #tpu.pipeline_mode<synchronous>, transform_indices = @transform_2, window_bounds = array<i64: 1, 32>}, {pipeline_mode = #tpu.pipeline_mode<synchronous>, transform_indices = @transform_3, window_bounds = array<i64: 32, 32>}, {pipeline_mode = #tpu.pipeline_mode<synchronous>, transform_indices = @transform_4, window_bounds = array<i64: 1, 32>}, {pipeline_mode = #tpu.pipeline_mode<synchronous>, transform_indices = @transform_5, window_bounds = array<i64: 32, 32>}, {pipeline_mode = #tpu.pipeline_mode<synchronous>, transform_indices = @transform_6, window_bounds = array<i64: 1, 32>}, {pipeline_mode = #tpu.pipeline_mode<synchronous>, transform_indices = @transform_7, window_bounds = array<i64: 32, 32>}, {pipeline_mode = #tpu.pipeline_mode<synchronous>, transform_indices = @transform_8, window_bounds = array<i64: 1, 32>}, {transform_indices = @transform_9, window_bounds = array<i64: 2, 8, 32>}, {transform_indices = @transform_10, window_bounds = array<i64: 2, 8, 8>}]} {
    %c0 = arith.constant 0 : index
    %c0_0 = arith.constant 0 : index
    %c0_1 = arith.constant 0 : index
    %0 = vector.load %arg1[%c0, %c0_0, %c0_1] : memref<2x8x32xf32, #tpu.memory_space<vmem>>, vector<2x8x32xf32>
    %1 = vector.shape_cast %0 : vector<2x8x32xf32> to vector<16x32xf32>
    %c0_2 = arith.constant 0 : index
    %c0_3 = arith.constant 0 : index
    %2 = vector.load %arg2[%c0_2, %c0_3] : memref<32x32xf32, #tpu.memory_space<vmem>>, vector<32x32xf32>
    %cst = arith.constant dense<0.000000e+00> : vector<16x32xf32>
    %3 = tpu.matmul %1, %2, %cst {dimension_numbers = #tpu.dot_dimension_numbers<[1], [0], [0], [1], [0, 0, 1, 1], [], []>} : vector<16x32xf32>, vector<32x32xf32>, vector<16x32xf32> -> vector<16x32xf32>
    %c0_4 = arith.constant 0 : index
    %c0_5 = arith.constant 0 : index
    %4 = vector.load %arg3[%c0_4, %c0_5] : memref<1x32xf32, #tpu.memory_space<vmem>>, vector<1x32xf32>
    %5 = vector.broadcast %4 : vector<1x32xf32> to vector<16x32xf32>
    %6 = arith.addf %3, %5 : vector<16x32xf32>
    %7 = vector.shape_cast %6 : vector<16x32xf32> to vector<2x8x32xf32>
    %c0_6 = arith.constant 0 : index
    %c0_7 = arith.constant 0 : index
    %c0_8 = arith.constant 0 : index
    %8 = vector.load %arg12[%c0_6, %c0_7, %c0_8] : memref<2x8x32xf32, #tpu.memory_space<vmem>>, vector<2x8x32xf32>
    tpu.vector_store %arg12[%c0_6, %c0_7, %c0_8], %7 {strides = array<i32>} : memref<2x8x32xf32, #tpu.memory_space<vmem>>, vector<2x8x32xf32>,
    %c0_9 = arith.constant 0 : index
    %c0_10 = arith.constant 0 : index
    %9 = vector.load %arg4[%c0_9, %c0_10] : memref<32x32xf32, #tpu.memory_space<vmem>>, vector<32x32xf32>
    %cst_11 = arith.constant dense<0.000000e+00> : vector<16x32xf32>
    %10 = tpu.matmul %1, %9, %cst_11 {dimension_numbers = #tpu.dot_dimension_numbers<[1], [0], [0], [1], [0, 0, 1, 1], [], []>} : vector<16x32xf32>, vector<32x32xf32>, vector<16x32xf32> -> vector<16x32xf32>
    %c0_12 = arith.constant 0 : index
    %c0_13 = arith.constant 0 : index
    %11 = vector.load %arg5[%c0_12, %c0_13] : memref<1x32xf32, #tpu.memory_space<vmem>>, vector<1x32xf32>
    %12 = vector.broadcast %11 : vector<1x32xf32> to vector<16x32xf32>
    %13 = arith.addf %10, %12 : vector<16x32xf32>
    %14 = vector.shape_cast %13 : vector<16x32xf32> to vector<2x8x32xf32>
    %c0_14 = arith.constant 0 : index
    %c0_15 = arith.constant 0 : index
    %c0_16 = arith.constant 0 : index
    %15 = vector.load %arg13[%c0_14, %c0_15, %c0_16] : memref<2x8x32xf32, #tpu.memory_space<vmem>>, vector<2x8x32xf32>
    tpu.vector_store %arg13[%c0_14, %c0_15, %c0_16], %14 {strides = array<i32>} : memref<2x8x32xf32, #tpu.memory_space<vmem>>, vector<2x8x32xf32>,
    %c0_17 = arith.constant 0 : index
    %c0_18 = arith.constant 0 : index
    %16 = vector.load %arg6[%c0_17, %c0_18] : memref<32x32xf32, #tpu.memory_space<vmem>>, vector<32x32xf32>
    %cst_19 = arith.constant dense<0.000000e+00> : vector<16x32xf32>
    %17 = tpu.matmul %1, %16, %cst_19 {dimension_numbers = #tpu.dot_dimension_numbers<[1], [0], [0], [1], [0, 0, 1, 1], [], []>} : vector<16x32xf32>, vector<32x32xf32>, vector<16x32xf32> -> vector<16x32xf32>
    %c0_20 = arith.constant 0 : index
    %c0_21 = arith.constant 0 : index
    %18 = vector.load %arg7[%c0_20, %c0_21] : memref<1x32xf32, #tpu.memory_space<vmem>>, vector<1x32xf32>
    %19 = vector.broadcast %18 : vector<1x32xf32> to vector<16x32xf32>
    %20 = arith.addf %17, %19 : vector<16x32xf32>
    %21 = vector.shape_cast %20 : vector<16x32xf32> to vector<2x8x32xf32>
    %c0_22 = arith.constant 0 : index
    %c0_23 = arith.constant 0 : index
    %c0_24 = arith.constant 0 : index
    %22 = vector.load %arg14[%c0_22, %c0_23, %c0_24] : memref<2x8x32xf32, #tpu.memory_space<vmem>>, vector<2x8x32xf32>
    tpu.vector_store %arg14[%c0_22, %c0_23, %c0_24], %21 {strides = array<i32>} : memref<2x8x32xf32, #tpu.memory_space<vmem>>, vector<2x8x32xf32>,
    %c0_i32 = arith.constant 0 : i32
    %c2_i32 = arith.constant 2 : i32
    %23 = arith.addi %c0_i32, %c2_i32 : i32
    %c1_i32 = arith.constant 1 : i32
    scf.for %arg16 = %c0_i32 to %23 step %c1_i32  : i32 {
      %24 = arith.index_cast %arg16 : i32 to index
      %c0_26 = arith.constant 0 : index
      %c0_27 = arith.constant 0 : index
      %25 = vector.load %arg12[%24, %c0_26, %c0_27] : memref<2x8x32xf32, #tpu.memory_space<vmem>>, vector<1x8x32xf32>
      %26 = vector.shape_cast %25 : vector<1x8x32xf32> to vector<8x32xf32>
      %27 = arith.index_cast %arg16 : i32 to index
      %c0_28 = arith.constant 0 : index
      %c0_29 = arith.constant 0 : index
      %28 = vector.load %arg13[%27, %c0_28, %c0_29] : memref<2x8x32xf32, #tpu.memory_space<vmem>>, vector<1x8x32xf32>
      %29 = vector.shape_cast %28 : vector<1x8x32xf32> to vector<8x32xf32>
      %30 = arith.index_cast %arg16 : i32 to index
      %c0_30 = arith.constant 0 : index
      %c0_31 = arith.constant 0 : index
      %31 = vector.load %arg14[%30, %c0_30, %c0_31] : memref<2x8x32xf32, #tpu.memory_space<vmem>>, vector<1x8x32xf32>
      %32 = vector.shape_cast %31 : vector<1x8x32xf32> to vector<8x32xf32>
      %33 = vector.extract_strided_slice %26 {offsets = [0, 0], sizes = [8, 8], strides = [1, 1]} : vector<8x32xf32> to vector<8x8xf32>
      %34 = vector.extract_strided_slice %29 {offsets = [0, 0], sizes = [8, 8], strides = [1, 1]} : vector<8x32xf32> to vector<8x8xf32>
      %35 = vector.extract_strided_slice %32 {offsets = [0, 0], sizes = [8, 8], strides = [1, 1]} : vector<8x32xf32> to vector<8x8xf32>
      %cst_32 = arith.constant dense<0.000000e+00> : vector<8x8xf32>
      %36 = tpu.matmul %33, %34, %cst_32 {dimension_numbers = #tpu.dot_dimension_numbers<[1], [1], [0], [0], [0, 0, 1, 0], [], []>} : vector<8x8xf32>, vector<8x8xf32>, vector<8x8xf32> -> vector<8x8xf32>
      %cst_33 = arith.constant dense<0xFF800000> : vector<8xf32>
      %37 = vector.multi_reduction <maximumf>, %36, %cst_33 [1] : vector<8x8xf32> to vector<8xf32>
      %38 = vector.shape_cast %37 : vector<8xf32> to vector<8x1xf32>
      %39 = vector.broadcast %38 : vector<8x1xf32> to vector<8x8xf32>
      %40 = arith.subf %36, %39 : vector<8x8xf32>
      %41 = math.exp %40 : vector<8x8xf32>
      %cst_34 = arith.constant dense<0.000000e+00> : vector<8xf32>
      %42 = vector.multi_reduction <add>, %41, %cst_34 [1] : vector<8x8xf32> to vector<8xf32>
      %43 = vector.shape_cast %42 : vector<8xf32> to vector<8x1xf32>
      %44 = tpu.reciprocal %43 : vector<8x1xf32> -> vector<8x1xf32>
      %45 = vector.broadcast %44 : vector<8x1xf32> to vector<8x8xf32>
      %46 = arith.mulf %41, %45 : vector<8x8xf32>
      %cst_35 = arith.constant 2.500000e-01 : f32
      %47 = vector.broadcast %cst_35 : f32 to vector<8x8xf32>
      %48 = arith.mulf %46, %47 : vector<8x8xf32>
      %49 = arith.index_cast %arg16 : i32 to index
      %c0_36 = arith.constant 0 : index
      %c0_37 = arith.constant 0 : index
      %50 = vector.load %arg11[%49, %c0_36, %c0_37] : memref<2x8x8xf32, #tpu.memory_space<vmem>>, vector<1x8x8xf32>
      %51 = vector.shape_cast %50 : vector<1x8x8xf32> to vector<8x8xf32>
      %52 = vector.shape_cast %48 : vector<8x8xf32> to vector<1x8x8xf32>
      tpu.vector_store %arg11[%49, %c0_36, %c0_37], %52 {strides = array<i32>} : memref<2x8x8xf32, #tpu.memory_space<vmem>>, vector<1x8x8xf32>,
      %cst_38 = arith.constant dense<0.000000e+00> : vector<8x8xf32>
      %53 = tpu.matmul %46, %35, %cst_38 {dimension_numbers = #tpu.dot_dimension_numbers<[1], [0], [0], [1], [0, 0, 1, 1], [], []>} : vector<8x8xf32>, vector<8x8xf32>, vector<8x8xf32> -> vector<8x8xf32>
      %c0_39 = arith.constant 0 : index
      %c0_40 = arith.constant 0 : index
      %54 = vector.load %arg15[%c0_39, %c0_40] : memref<8x32xf32, #tpu.memory_space<vmem>>, vector<8x8xf32>
      tpu.vector_store %arg15[%c0_39, %c0_40], %53 {strides = array<i32>} : memref<8x32xf32, #tpu.memory_space<vmem>>, vector<8x8xf32>,
      %55 = vector.extract_strided_slice %26 {offsets = [0, 8], sizes = [8, 8], strides = [1, 1]} : vector<8x32xf32> to vector<8x8xf32>
      %56 = vector.extract_strided_slice %29 {offsets = [0, 8], sizes = [8, 8], strides = [1, 1]} : vector<8x32xf32> to vector<8x8xf32>
      %57 = vector.extract_strided_slice %32 {offsets = [0, 8], sizes = [8, 8], strides = [1, 1]} : vector<8x32xf32> to vector<8x8xf32>
      %cst_41 = arith.constant dense<0.000000e+00> : vector<8x8xf32>
      %58 = tpu.matmul %55, %56, %cst_41 {dimension_numbers = #tpu.dot_dimension_numbers<[1], [1], [0], [0], [0, 0, 1, 0], [], []>} : vector<8x8xf32>, vector<8x8xf32>, vector<8x8xf32> -> vector<8x8xf32>
      %cst_42 = arith.constant dense<0xFF800000> : vector<8xf32>
      %59 = vector.multi_reduction <maximumf>, %58, %cst_42 [1] : vector<8x8xf32> to vector<8xf32>
      %60 = vector.shape_cast %59 : vector<8xf32> to vector<8x1xf32>
      %61 = vector.broadcast %60 : vector<8x1xf32> to vector<8x8xf32>
      %62 = arith.subf %58, %61 : vector<8x8xf32>
      %63 = math.exp %62 : vector<8x8xf32>
      %cst_43 = arith.constant dense<0.000000e+00> : vector<8xf32>
      %64 = vector.multi_reduction <add>, %63, %cst_43 [1] : vector<8x8xf32> to vector<8xf32>
      %65 = vector.shape_cast %64 : vector<8xf32> to vector<8x1xf32>
      %66 = tpu.reciprocal %65 : vector<8x1xf32> -> vector<8x1xf32>
      %67 = vector.broadcast %66 : vector<8x1xf32> to vector<8x8xf32>
      %68 = arith.mulf %63, %67 : vector<8x8xf32>
      %cst_44 = arith.constant 2.500000e-01 : f32
      %69 = vector.broadcast %cst_44 : f32 to vector<8x8xf32>
      %70 = arith.mulf %68, %69 : vector<8x8xf32>
      %71 = arith.index_cast %arg16 : i32 to index
      %c0_45 = arith.constant 0 : index
      %c0_46 = arith.constant 0 : index
      %72 = vector.load %arg11[%71, %c0_45, %c0_46] : memref<2x8x8xf32, #tpu.memory_space<vmem>>, vector<1x8x8xf32>
      %73 = vector.shape_cast %72 : vector<1x8x8xf32> to vector<8x8xf32>
      %74 = arith.addf %73, %70 : vector<8x8xf32>
      %75 = arith.index_cast %arg16 : i32 to index
      %c0_47 = arith.constant 0 : index
      %c0_48 = arith.constant 0 : index
      %76 = vector.load %arg11[%75, %c0_47, %c0_48] : memref<2x8x8xf32, #tpu.memory_space<vmem>>, vector<1x8x8xf32>
      %77 = vector.shape_cast %76 : vector<1x8x8xf32> to vector<8x8xf32>
      %78 = vector.shape_cast %74 : vector<8x8xf32> to vector<1x8x8xf32>
      tpu.vector_store %arg11[%75, %c0_47, %c0_48], %78 {strides = array<i32>} : memref<2x8x8xf32, #tpu.memory_space<vmem>>, vector<1x8x8xf32>,
      %cst_49 = arith.constant dense<0.000000e+00> : vector<8x8xf32>
      %79 = tpu.matmul %68, %57, %cst_49 {dimension_numbers = #tpu.dot_dimension_numbers<[1], [0], [0], [1], [0, 0, 1, 1], [], []>} : vector<8x8xf32>, vector<8x8xf32>, vector<8x8xf32> -> vector<8x8xf32>
      %c0_50 = arith.constant 0 : index
      %c8 = arith.constant 8 : index
      %80 = vector.load %arg15[%c0_50, %c8] : memref<8x32xf32, #tpu.memory_space<vmem>>, vector<8x8xf32>
      tpu.vector_store %arg15[%c0_50, %c8], %79 {strides = array<i32>} : memref<8x32xf32, #tpu.memory_space<vmem>>, vector<8x8xf32>,
      %81 = vector.extract_strided_slice %26 {offsets = [0, 16], sizes = [8, 8], strides = [1, 1]} : vector<8x32xf32> to vector<8x8xf32>
      %82 = vector.extract_strided_slice %29 {offsets = [0, 16], sizes = [8, 8], strides = [1, 1]} : vector<8x32xf32> to vector<8x8xf32>
      %83 = vector.extract_strided_slice %32 {offsets = [0, 16], sizes = [8, 8], strides = [1, 1]} : vector<8x32xf32> to vector<8x8xf32>
      %cst_51 = arith.constant dense<0.000000e+00> : vector<8x8xf32>
      %84 = tpu.matmul %81, %82, %cst_51 {dimension_numbers = #tpu.dot_dimension_numbers<[1], [1], [0], [0], [0, 0, 1, 0], [], []>} : vector<8x8xf32>, vector<8x8xf32>, vector<8x8xf32> -> vector<8x8xf32>
      %cst_52 = arith.constant dense<0xFF800000> : vector<8xf32>
      %85 = vector.multi_reduction <maximumf>, %84, %cst_52 [1] : vector<8x8xf32> to vector<8xf32>
      %86 = vector.shape_cast %85 : vector<8xf32> to vector<8x1xf32>
      %87 = vector.broadcast %86 : vector<8x1xf32> to vector<8x8xf32>
      %88 = arith.subf %84, %87 : vector<8x8xf32>
      %89 = math.exp %88 : vector<8x8xf32>
      %cst_53 = arith.constant dense<0.000000e+00> : vector<8xf32>
      %90 = vector.multi_reduction <add>, %89, %cst_53 [1] : vector<8x8xf32> to vector<8xf32>
      %91 = vector.shape_cast %90 : vector<8xf32> to vector<8x1xf32>
      %92 = tpu.reciprocal %91 : vector<8x1xf32> -> vector<8x1xf32>
      %93 = vector.broadcast %92 : vector<8x1xf32> to vector<8x8xf32>
      %94 = arith.mulf %89, %93 : vector<8x8xf32>
      %cst_54 = arith.constant 2.500000e-01 : f32
      %95 = vector.broadcast %cst_54 : f32 to vector<8x8xf32>
      %96 = arith.mulf %94, %95 : vector<8x8xf32>
      %97 = arith.index_cast %arg16 : i32 to index
      %c0_55 = arith.constant 0 : index
      %c0_56 = arith.constant 0 : index
      %98 = vector.load %arg11[%97, %c0_55, %c0_56] : memref<2x8x8xf32, #tpu.memory_space<vmem>>, vector<1x8x8xf32>
      %99 = vector.shape_cast %98 : vector<1x8x8xf32> to vector<8x8xf32>
      %100 = arith.addf %99, %96 : vector<8x8xf32>
      %101 = arith.index_cast %arg16 : i32 to index
      %c0_57 = arith.constant 0 : index
      %c0_58 = arith.constant 0 : index
      %102 = vector.load %arg11[%101, %c0_57, %c0_58] : memref<2x8x8xf32, #tpu.memory_space<vmem>>, vector<1x8x8xf32>
      %103 = vector.shape_cast %102 : vector<1x8x8xf32> to vector<8x8xf32>
      %104 = vector.shape_cast %100 : vector<8x8xf32> to vector<1x8x8xf32>
      tpu.vector_store %arg11[%101, %c0_57, %c0_58], %104 {strides = array<i32>} : memref<2x8x8xf32, #tpu.memory_space<vmem>>, vector<1x8x8xf32>,
      %cst_59 = arith.constant dense<0.000000e+00> : vector<8x8xf32>
      %105 = tpu.matmul %94, %83, %cst_59 {dimension_numbers = #tpu.dot_dimension_numbers<[1], [0], [0], [1], [0, 0, 1, 1], [], []>} : vector<8x8xf32>, vector<8x8xf32>, vector<8x8xf32> -> vector<8x8xf32>
      %c0_60 = arith.constant 0 : index
      %c16 = arith.constant 16 : index
      %106 = vector.load %arg15[%c0_60, %c16] : memref<8x32xf32, #tpu.memory_space<vmem>>, vector<8x8xf32>
      tpu.vector_store %arg15[%c0_60, %c16], %105 {strides = array<i32>} : memref<8x32xf32, #tpu.memory_space<vmem>>, vector<8x8xf32>,
      %107 = vector.extract_strided_slice %26 {offsets = [0, 24], sizes = [8, 8], strides = [1, 1]} : vector<8x32xf32> to vector<8x8xf32>
      %108 = vector.extract_strided_slice %29 {offsets = [0, 24], sizes = [8, 8], strides = [1, 1]} : vector<8x32xf32> to vector<8x8xf32>
      %109 = vector.extract_strided_slice %32 {offsets = [0, 24], sizes = [8, 8], strides = [1, 1]} : vector<8x32xf32> to vector<8x8xf32>
      %cst_61 = arith.constant dense<0.000000e+00> : vector<8x8xf32>
      %110 = tpu.matmul %107, %108, %cst_61 {dimension_numbers = #tpu.dot_dimension_numbers<[1], [1], [0], [0], [0, 0, 1, 0], [], []>} : vector<8x8xf32>, vector<8x8xf32>, vector<8x8xf32> -> vector<8x8xf32>
      %cst_62 = arith.constant dense<0xFF800000> : vector<8xf32>
      %111 = vector.multi_reduction <maximumf>, %110, %cst_62 [1] : vector<8x8xf32> to vector<8xf32>
      %112 = vector.shape_cast %111 : vector<8xf32> to vector<8x1xf32>
      %113 = vector.broadcast %112 : vector<8x1xf32> to vector<8x8xf32>
      %114 = arith.subf %110, %113 : vector<8x8xf32>
      %115 = math.exp %114 : vector<8x8xf32>
      %cst_63 = arith.constant dense<0.000000e+00> : vector<8xf32>
      %116 = vector.multi_reduction <add>, %115, %cst_63 [1] : vector<8x8xf32> to vector<8xf32>
      %117 = vector.shape_cast %116 : vector<8xf32> to vector<8x1xf32>
      %118 = tpu.reciprocal %117 : vector<8x1xf32> -> vector<8x1xf32>
      %119 = vector.broadcast %118 : vector<8x1xf32> to vector<8x8xf32>
      %120 = arith.mulf %115, %119 : vector<8x8xf32>
      %cst_64 = arith.constant 2.500000e-01 : f32
      %121 = vector.broadcast %cst_64 : f32 to vector<8x8xf32>
      %122 = arith.mulf %120, %121 : vector<8x8xf32>
      %123 = arith.index_cast %arg16 : i32 to index
      %c0_65 = arith.constant 0 : index
      %c0_66 = arith.constant 0 : index
      %124 = vector.load %arg11[%123, %c0_65, %c0_66] : memref<2x8x8xf32, #tpu.memory_space<vmem>>, vector<1x8x8xf32>
      %125 = vector.shape_cast %124 : vector<1x8x8xf32> to vector<8x8xf32>
      %126 = arith.addf %125, %122 : vector<8x8xf32>
      %127 = arith.index_cast %arg16 : i32 to index
      %c0_67 = arith.constant 0 : index
      %c0_68 = arith.constant 0 : index
      %128 = vector.load %arg11[%127, %c0_67, %c0_68] : memref<2x8x8xf32, #tpu.memory_space<vmem>>, vector<1x8x8xf32>
      %129 = vector.shape_cast %128 : vector<1x8x8xf32> to vector<8x8xf32>
      %130 = vector.shape_cast %126 : vector<8x8xf32> to vector<1x8x8xf32>
      tpu.vector_store %arg11[%127, %c0_67, %c0_68], %130 {strides = array<i32>} : memref<2x8x8xf32, #tpu.memory_space<vmem>>, vector<1x8x8xf32>,
      %cst_69 = arith.constant dense<0.000000e+00> : vector<8x8xf32>
      %131 = tpu.matmul %120, %109, %cst_69 {dimension_numbers = #tpu.dot_dimension_numbers<[1], [0], [0], [1], [0, 0, 1, 1], [], []>} : vector<8x8xf32>, vector<8x8xf32>, vector<8x8xf32> -> vector<8x8xf32>
      %c0_70 = arith.constant 0 : index
      %c24 = arith.constant 24 : index
      %132 = vector.load %arg15[%c0_70, %c24] : memref<8x32xf32, #tpu.memory_space<vmem>>, vector<8x8xf32>
      tpu.vector_store %arg15[%c0_70, %c24], %131 {strides = array<i32>} : memref<8x32xf32, #tpu.memory_space<vmem>>, vector<8x8xf32>,
      %c0_71 = arith.constant 0 : index
      %c0_72 = arith.constant 0 : index
      %133 = vector.load %arg15[%c0_71, %c0_72] : memref<8x32xf32, #tpu.memory_space<vmem>>, vector<8x32xf32>
      %c0_73 = arith.constant 0 : index
      %c0_74 = arith.constant 0 : index
      %134 = vector.load %arg8[%c0_73, %c0_74] : memref<32x32xf32, #tpu.memory_space<vmem>>, vector<32x32xf32>
      %cst_75 = arith.constant dense<0.000000e+00> : vector<8x32xf32>
      %135 = tpu.matmul %133, %134, %cst_75 {dimension_numbers = #tpu.dot_dimension_numbers<[1], [0], [0], [1], [0, 0, 1, 1], [], []>} : vector<8x32xf32>, vector<32x32xf32>, vector<8x32xf32> -> vector<8x32xf32>
      %c0_76 = arith.constant 0 : index
      %c0_77 = arith.constant 0 : index
      %136 = vector.load %arg9[%c0_76, %c0_77] : memref<1x32xf32, #tpu.memory_space<vmem>>, vector<1x32xf32>
      %137 = vector.broadcast %136 : vector<1x32xf32> to vector<8x32xf32>
      %138 = arith.addf %135, %137 : vector<8x32xf32>
      %139 = arith.index_cast %arg16 : i32 to index
      %c0_78 = arith.constant 0 : index
      %c0_79 = arith.constant 0 : index
      %140 = vector.load %arg10[%139, %c0_78, %c0_79] : memref<2x8x32xf32, #tpu.memory_space<vmem>>, vector<1x8x32xf32>
      %141 = vector.shape_cast %140 : vector<1x8x32xf32> to vector<8x32xf32>
      %142 = vector.shape_cast %138 : vector<8x32xf32> to vector<1x8x32xf32>
      tpu.vector_store %arg10[%139, %c0_78, %c0_79], %142 {strides = array<i32>} : memref<2x8x32xf32, #tpu.memory_space<vmem>>, vector<1x8x32xf32>,
    }
    %c2_i32_25 = arith.constant 2 : i32
    return
  }
  func.func @transform_0(%arg0: i32) -> (i32, i32, i32) {
    %c0_i32 = arith.constant 0 : i32
    %c0_i32_0 = arith.constant 0 : i32
    %c0_i32_1 = arith.constant 0 : i32
    return %arg0, %c0_i32, %c0_i32_0 : i32, i32, i32
  }
  func.func @transform_1(%arg0: i32) -> (i32, i32) {
    %c0_i32 = arith.constant 0 : i32
    %c0_i32_0 = arith.constant 0 : i32
    %c0_i32_1 = arith.constant 0 : i32
    return %c0_i32, %c0_i32_0 : i32, i32
  }
  func.func @transform_2(%arg0: i32) -> (i32, i32) {
    %c0_i32 = arith.constant 0 : i32
    %c0_i32_0 = arith.constant 0 : i32
    %c0_i32_1 = arith.constant 0 : i32
    return %c0_i32, %c0_i32_0 : i32, i32
  }
  func.func @transform_3(%arg0: i32) -> (i32, i32) {
    %c0_i32 = arith.constant 0 : i32
    %c0_i32_0 = arith.constant 0 : i32
    %c0_i32_1 = arith.constant 0 : i32
    return %c0_i32, %c0_i32_0 : i32, i32
  }
  func.func @transform_4(%arg0: i32) -> (i32, i32) {
    %c0_i32 = arith.constant 0 : i32
    %c0_i32_0 = arith.constant 0 : i32
    %c0_i32_1 = arith.constant 0 : i32
    return %c0_i32, %c0_i32_0 : i32, i32
  }
  func.func @transform_5(%arg0: i32) -> (i32, i32) {
    %c0_i32 = arith.constant 0 : i32
    %c0_i32_0 = arith.constant 0 : i32
    %c0_i32_1 = arith.constant 0 : i32
    return %c0_i32, %c0_i32_0 : i32, i32
  }
  func.func @transform_6(%arg0: i32) -> (i32, i32) {
    %c0_i32 = arith.constant 0 : i32
    %c0_i32_0 = arith.constant 0 : i32
    %c0_i32_1 = arith.constant 0 : i32
    return %c0_i32, %c0_i32_0 : i32, i32
  }
  func.func @transform_7(%arg0: i32) -> (i32, i32) {
    %c0_i32 = arith.constant 0 : i32
    %c0_i32_0 = arith.constant 0 : i32
    %c0_i32_1 = arith.constant 0 : i32
    return %c0_i32, %c0_i32_0 : i32, i32
  }
  func.func @transform_8(%arg0: i32) -> (i32, i32) {
    %c0_i32 = arith.constant 0 : i32
    %c0_i32_0 = arith.constant 0 : i32
    %c0_i32_1 = arith.constant 0 : i32
    return %c0_i32, %c0_i32_0 : i32, i32
  }
  func.func @transform_9(%arg0: i32) -> (i32, i32, i32) {
    %c0_i32 = arith.constant 0 : i32
    %c0_i32_0 = arith.constant 0 : i32
    %c0_i32_1 = arith.constant 0 : i32
    return %arg0, %c0_i32, %c0_i32_0 : i32, i32, i32
  }
  func.func @transform_10(%arg0: i32) -> (i32, i32, i32) {
    %c0_i32 = arith.constant 0 : i32
    %c0_i32_0 = arith.constant 0 : i32
    %c0_i32_1 = arith.constant 0 : i32
    return %arg0, %c0_i32, %c0_i32_0 : i32, i32, i32
  }
}

</mosaic_0001>

<llo_original>
// kernel: tpu_custom_call.1
$region0: #{tpu_custom_call.1}
  #allocation0 [shape = 'u32[]', space=smem, size = 0x4, offset = 0x4, fixed_abs, tag = 'smem constant byte address 0x4 - core index']
  #allocation1 [shape = 'u32[72,128]{1,0:T(1,128)}', space=vmem, size = 0x9000, scoped, tag = 'internal scratch']
  #allocation2 [shape = 'f32[2,8,32]{2,1,0:T(8,128)}', space=vmem, size = 0x2000, scoped, tag = 'scratch operand']
  #allocation3 [shape = 'f32[2,8,32]{2,1,0:T(8,128)}', space=vmem, size = 0x2000, scoped, tag = 'scratch operand']
  #allocation4 [shape = 'f32[2,8,32]{2,1,0:T(8,128)}', space=vmem, size = 0x2000, scoped, tag = 'scratch operand']
  #allocation5 [shape = 'f32[8,32]{1,0:T(8,128)}', space=vmem, size = 0x1000, scoped, tag = 'scratch operand']
  %s0 = inlined_call_operand.hbm [shape: f32[2,8,32], index: 0, kind: input, shape index: {}]
  %s1 = inlined_call_operand.hbm [shape: f32[32,32], index: 1, kind: input, shape index: {}]
  %s2 = inlined_call_operand.vmem [shape: f32[1,32], index: 2, kind: input, shape index: {}]
  %s3 = inlined_call_operand.hbm [shape: f32[32,32], index: 3, kind: input, shape index: {}]
  %s4 = inlined_call_operand.vmem [shape: f32[1,32], index: 4, kind: input, shape index: {}]
  %s5 = inlined_call_operand.hbm [shape: f32[32,32], index: 5, kind: input, shape index: {}]
  %s6 = inlined_call_operand.vmem [shape: f32[1,32], index: 6, kind: input, shape index: {}]
  %s7 = inlined_call_operand.hbm [shape: f32[32,32], index: 7, kind: input, shape index: {}]
  %s8 = inlined_call_operand.vmem [shape: f32[1,32], index: 8, kind: input, shape index: {}]
  %s9 = inlined_call_operand.hbm [shape: f32[2,8,32], index: 9, kind: output, shape index: {0}]
  %s10 = inlined_call_operand.hbm [shape: f32[2,8,8], index: 10, kind: output, shape index: {1}]
  %11 = xla_tuple %s9, %s10
  %s12 = sld [smem:[#allocation0]]
  $region81: #{tpu_custom_call.1} parent=0
    _
  %s14 = ssub.s32 1, %s12
  %s15 = scalar_select 0, %s14, %s12
  $region1: #{tpu_custom_call.1} parent=0
    #allocation6 [shape = 'u8[8192]{0}', space=vmem, size = 0x2000, scoped, tag = 'input window, operand 0, single buffered']
    #allocation7 [shape = 's32[1]{0}', space=sflag, size = 0x4, scoped, tag = 'scoped memory for tpu_custom_call.1']
    #allocation8 [shape = 's32[1]{0}', space=sflag, size = 0x4, scoped, tag = 'scoped memory for tpu_custom_call.1']
    #allocation9 [shape = 'u8[16384]{0}', space=vmem, size = 0x4000, scoped, tag = 'input window, operand 1, single buffered']
    #allocation10 [shape = 's32[1]{0}', space=sflag, size = 0x4, scoped, tag = 'scoped memory for tpu_custom_call.1']
    #allocation11 [shape = 'u8[16384]{0}', space=vmem, size = 0x4000, scoped, tag = 'input window, operand 3, single buffered']
    #allocation12 [shape = 'u8[16384]{0}', space=vmem, size = 0x4000, scoped, tag = 'input window, operand 5, single buffered']
    #allocation13 [shape = 's32[1]{0}', space=sflag, size = 0x4, scoped, tag = 'scoped memory for tpu_custom_call.1']
    #allocation14 [shape = 'u8[16384]{0}', space=vmem, size = 0x4000, scoped, tag = 'input window, operand 7, single buffered']
    #allocation15 [shape = 'u8[8192]{0}', space=vmem, size = 0x2000, scoped, tag = 'output window, operand 0, single buffered']
    #allocation16 [shape = 'u8[8192]{0}', space=vmem, size = 0x2000, scoped, tag = 'output window, operand 1, single buffered']
    #allocation17 [shape = 's32[1]{0}', space=sflag, size = 0x4, scoped, tag = 'scoped memory for tpu_custom_call.1']
    %16 = vsyncpa [#allocation7], 0
    %17 = vsyncpa [#allocation10], 0
    %18 = vsyncpa [#allocation13], 0
    %19 = vsyncpa [#allocation8], 0
    %20 = vsyncpa [#allocation17], 0
    // Predicated region
    $region2: #{tpu_custom_call.1} parent=1 // pred_check
      _
    $region3: #{tpu_custom_call.1} parent=1 // pred_check_branch
      %22 = sbr.rel (0) target = $region5
    $region4: #{tpu_custom_call.1} parent=1 // pred_region
      %24 = vsyncadd [#allocation7], 0
      %s25 = sshll.u32 %s0, 4
      %s26 = int_to_ptr.hbm [resolvable:$true] %s25
      %s27 = sshll.u32 [#allocation6], 4
      %s28 = int_to_ptr.vmem [resolvable:$true] %s27
      %33 = dma.hbm_to_vmem [thread:$0]  %s26, 256, %s28, [#allocation7], 128, 128, 8
    $region5: #{tpu_custom_call.1} parent=1 // pred_fallthru
      _
    // Predicated region
    $region6: #{tpu_custom_call.1} parent=1 // pred_check
      _
    $region7: #{tpu_custom_call.1} parent=1 // pred_check_branch
      %35 = sbr.rel (0) target = $region9
    $region8: #{tpu_custom_call.1} parent=1 // pred_region
      %37 = vsyncadd [#allocation10], 0
      %s38 = sshll.u32 %s1, 4
      %s39 = int_to_ptr.hbm [resolvable:$true] %s38
      %s40 = sshll.u32 [#allocation9], 4
      %s41 = int_to_ptr.vmem [resolvable:$true] %s40
      %46 = dma.hbm_to_vmem [thread:$0]  %s39, 512, %s41, [#allocation10], 128, 128, 8
    $region9: #{tpu_custom_call.1} parent=1 // pred_fallthru
      _
    // Predicated region
    $region10: #{tpu_custom_call.1} parent=1 // pred_check
      _
    $region11: #{tpu_custom_call.1} parent=1 // pred_check_branch
      %48 = sbr.rel (0) target = $region13
    $region12: #{tpu_custom_call.1} parent=1 // pred_region
      _
    $region13: #{tpu_custom_call.1} parent=1 // pred_fallthru
      _
    // Predicated region
    $region14: #{tpu_custom_call.1} parent=1 // pred_check
      _
    $region15: #{tpu_custom_call.1} parent=1 // pred_check_branch
      %50 = sbr.rel (0) target = $region17
    $region16: #{tpu_custom_call.1} parent=1 // pred_region
      %52 = vsyncadd [#allocation10], 0
      %s53 = sshll.u32 %s3, 4
      %s54 = int_to_ptr.hbm [resolvable:$true] %s53
      %s55 = sshll.u32 [#allocation11], 4
      %s56 = int_to_ptr.vmem [resolvable:$true] %s55
      %61 = dma.hbm_to_vmem [thread:$0]  %s54, 512, %s56, [#allocation10], 128, 128, 8
    $region17: #{tpu_custom_call.1} parent=1 // pred_fallthru
      _
    // Predicated region
    $region18: #{tpu_custom_call.1} parent=1 // pred_check
      _
    $region19: #{tpu_custom_call.1} parent=1 // pred_check_branch
      %63 = sbr.rel (0) target = $region21
    $region20: #{tpu_custom_call.1} parent=1 // pred_region
      _
    $region21: #{tpu_custom_call.1} parent=1 // pred_fallthru
      _
    // Predicated region
    $region22: #{tpu_custom_call.1} parent=1 // pred_check
      _
    $region23: #{tpu_custom_call.1} parent=1 // pred_check_branch
      %65 = sbr.rel (0) target = $region25
    $region24: #{tpu_custom_call.1} parent=1 // pred_region
      %67 = vsyncadd [#allocation13], 0
      %s68 = sshll.u32 %s5, 4
      %s69 = int_to_ptr.hbm [resolvable:$true] %s68
      %s70 = sshll.u32 [#allocation12], 4
      %s71 = int_to_ptr.vmem [resolvable:$true] %s70
      %76 = dma.hbm_to_vmem [thread:$0]  %s69, 512, %s71, [#allocation13], 128, 128, 8
    $region25: #{tpu_custom_call.1} parent=1 // pred_fallthru
      _
    // Predicated region
    $region26: #{tpu_custom_call.1} parent=1 // pred_check
      _
    $region27: #{tpu_custom_call.1} parent=1 // pred_check_branch
      %78 = sbr.rel (0) target = $region29
    $region28: #{tpu_custom_call.1} parent=1 // pred_region
      _
    $region29: #{tpu_custom_call.1} parent=1 // pred_fallthru
      _
    // Predicated region
    $region30: #{tpu_custom_call.1} parent=1 // pred_check
      _
    $region31: #{tpu_custom_call.1} parent=1 // pred_check_branch
      %80 = sbr.rel (0) target = $region33
    $region32: #{tpu_custom_call.1} parent=1 // pred_region
      %82 = vsyncadd [#allocation13], 0
      %s83 = sshll.u32 %s7, 4
      %s84 = int_to_ptr.hbm [resolvable:$true] %s83
      %s85 = sshll.u32 [#allocation14], 4
      %s86 = int_to_ptr.vmem [resolvable:$true] %s85
      %91 = dma.hbm_to_vmem [thread:$0]  %s84, 512, %s86, [#allocation13], 128, 128, 8
    $region33: #{tpu_custom_call.1} parent=1 // pred_fallthru
      _
    // Predicated region
    $region34: #{tpu_custom_call.1} parent=1 // pred_check
      _
    $region35: #{tpu_custom_call.1} parent=1 // pred_check_branch
      %93 = sbr.rel (0) target = $region37
    $region36: #{tpu_custom_call.1} parent=1 // pred_region
      _
    $region37: #{tpu_custom_call.1} parent=1 // pred_fallthru
      _
    // Predicated region
    $region38: #{tpu_custom_call.1} parent=1 // pred_check
      _
    $region39: #{tpu_custom_call.1} parent=1 // pred_check_branch
      %95 = sbr.rel (0) target = $region41
    $region40: #{tpu_custom_call.1} parent=1 // pred_region
      %97 = dma.done [#allocation7], 256
    $region41: #{tpu_custom_call.1} parent=1 // pred_fallthru
      _
    // Predicated region
    $region42: #{tpu_custom_call.1} parent=1 // pred_check
      _
    $region43: #{tpu_custom_call.1} parent=1 // pred_check_branch
      %99 = sbr.rel (0) target = $region45
    $region44: #{tpu_custom_call.1} parent=1 // pred_region
      %101 = dma.done [#allocation10], 512
    $region45: #{tpu_custom_call.1} parent=1 // pred_fallthru
      _
    // Predicated region
    $region46: #{tpu_custom_call.1} parent=1 // pred_check
      _
    $region47: #{tpu_custom_call.1} parent=1 // pred_check_branch
      %103 = sbr.rel (0) target = $region49
    $region48: #{tpu_custom_call.1} parent=1 // pred_region
      %105 = dma.done [#allocation10], 512
    $region49: #{tpu_custom_call.1} parent=1 // pred_fallthru
      _
    // Predicated region
    $region50: #{tpu_custom_call.1} parent=1 // pred_check
      _
    $region51: #{tpu_custom_call.1} parent=1 // pred_check_branch
      %107 = sbr.rel (0) target = $region53
    $region52: #{tpu_custom_call.1} parent=1 // pred_region
      %109 = dma.done [#allocation13], 512
    $region53: #{tpu_custom_call.1} parent=1 // pred_fallthru
      _
    // Predicated region
    $region54: #{tpu_custom_call.1} parent=1 // pred_check
      _
    $region55: #{tpu_custom_call.1} parent=1 // pred_check_branch
      %111 = sbr.rel (0) target = $region57
    $region56: #{tpu_custom_call.1} parent=1 // pred_region
      %113 = dma.done [#allocation13], 512
    $region57: #{tpu_custom_call.1} parent=1 // pred_fallthru
      _
    %v114 = vld [vmem:[#allocation6] sm:$0xff]
    %v115 = vld [vmem:[#allocation6 + $0x8] sm:$0xff]
    %v116 = vld [vmem:[#allocation9] sm:$0xff]
    %v117 = vld [vmem:[#allocation9 + $0x8] sm:$0xff]
    %v118 = vld [vmem:[#allocation9 + $0x10] sm:$0xff]
    %v119 = vld [vmem:[#allocation9 + $0x18] sm:$0xff]
    %v120 = vld [vmem:[%s2] sm:$0x1]
    %v122 = vperm.slane %v120, 0
    %vm124 = vcmask 261120
    %v126 = vsel %vm124, %v114, 0
    %v129 = vsel %vm124, %v115, 0
    %131 = vmatpush.msra.mxu0 0.0
    %132 = vmatpush.msra.mxu0 0.0
    %133 = vmatpush.msra.mxu0 0.0
    %134 = vmatpush.msra.mxu0 0.0
    %135 = vmatpush.msra.mxu0 0.0
    %136 = vmatpush.msra.mxu0 0.0
    %137 = vmatpush.msra.mxu0 0.0
    %138 = vmatpush.msra.mxu0 0.0
    %139 = vmatpush.msra.mxu0 0.0
    %140 = vmatpush.msra.mxu0 0.0
    %141 = vmatpush.msra.mxu0 0.0
    %142 = vmatpush.msra.mxu0 0.0
    %143 = vmatpush.msra.mxu0 %v119
    %144 = vmatpush.msra.mxu0 %v118
    %145 = vmatpush.msra.mxu0 %v117
    %146 = vmatpush.msra.mxu0 %v116
    %147 = vmatmul.f32.gmra.mxu0 %v126
    %v148 = vpop.f32.mrf.mxu0
    %v149 = vadd.f32 %v122, %v148
    %150 = vmatmul.f32.gmra.mxu0 %v129
    %v151 = vpop.f32.mrf.mxu0
    %v152 = vadd.f32 %v122, %v151
    %153 = vdwg.mxu0
    %154 = vst.msk [vmem:[#allocation2] sm:$0xff] %vm124, %v149
    %155 = vst.msk [vmem:[#allocation2 + $0x8] sm:$0xff] %vm124, %v152
    %v156 = vld [vmem:[#allocation11] sm:$0xff]
    %v157 = vld [vmem:[#allocation11 + $0x8] sm:$0xff]
    %v158 = vld [vmem:[#allocation11 + $0x10] sm:$0xff]
    %v159 = vld [vmem:[#allocation11 + $0x18] sm:$0xff]
    %v160 = vld [vmem:[%s4] sm:$0x1]
    %v162 = vperm.slane %v160, 0
    %164 = vmatpush.msra.mxu0 0.0
    %165 = vmatpush.msra.mxu0 0.0
    %166 = vmatpush.msra.mxu0 0.0
    %167 = vmatpush.msra.mxu0 0.0
    %168 = vmatpush.msra.mxu0 0.0
    %169 = vmatpush.msra.mxu0 0.0
    %170 = vmatpush.msra.mxu0 0.0
    %171 = vmatpush.msra.mxu0 0.0
    %172 = vmatpush.msra.mxu0 0.0
    %173 = vmatpush.msra.mxu0 0.0
    %174 = vmatpush.msra.mxu0 0.0
    %175 = vmatpush.msra.mxu0 0.0
    %176 = vmatpush.msra.mxu0 %v159
    %177 = vmatpush.msra.mxu0 %v158
    %178 = vmatpush.msra.mxu0 %v157
    %179 = vmatpush.msra.mxu0 %v156
    %180 = vmatmul.f32.gmra.mxu0 %v126
    %v181 = vpop.f32.mrf.mxu0
    %v182 = vadd.f32 %v162, %v181
    %183 = vmatmul.f32.gmra.mxu0 %v129
    %v184 = vpop.f32.mrf.mxu0
    %v185 = vadd.f32 %v162, %v184
    %186 = vdwg.mxu0
    %187 = vst.msk [vmem:[#allocation3] sm:$0xff] %vm124, %v182
    %188 = vst.msk [vmem:[#allocation3 + $0x8] sm:$0xff] %vm124, %v185
    %v189 = vld [vmem:[#allocation12] sm:$0xff]
    %v190 = vld [vmem:[#allocation12 + $0x8] sm:$0xff]
    %v191 = vld [vmem:[#allocation12 + $0x10] sm:$0xff]
    %v192 = vld [vmem:[#allocation12 + $0x18] sm:$0xff]
    %v193 = vld [vmem:[%s6] sm:$0x1]
    %v195 = vperm.slane %v193, 0
    %197 = vmatpush.msra.mxu0 0.0
    %198 = vmatpush.msra.mxu0 0.0
    %199 = vmatpush.msra.mxu0 0.0
    %200 = vmatpush.msra.mxu0 0.0
    %201 = vmatpush.msra.mxu0 0.0
    %202 = vmatpush.msra.mxu0 0.0
    %203 = vmatpush.msra.mxu0 0.0
    %204 = vmatpush.msra.mxu0 0.0
    %205 = vmatpush.msra.mxu0 0.0
    %206 = vmatpush.msra.mxu0 0.0
    %207 = vmatpush.msra.mxu0 0.0
    %208 = vmatpush.msra.mxu0 0.0
    %209 = vmatpush.msra.mxu0 %v192
    %210 = vmatpush.msra.mxu0 %v191
    %211 = vmatpush.msra.mxu0 %v190
    %212 = vmatpush.msra.mxu0 %v189
    %213 = vmatmul.f32.gmra.mxu0 %v126
    %v214 = vpop.f32.mrf.mxu0
    %v215 = vadd.f32 %v195, %v214
    %216 = vmatmul.f32.gmra.mxu0 %v129
    %v217 = vpop.f32.mrf.mxu0
    %v218 = vadd.f32 %v195, %v217
    %219 = vdwg.mxu0
    %220 = vst.msk [vmem:[#allocation4] sm:$0xff] %vm124, %v215
    %221 = vst.msk [vmem:[#allocation4 + $0x8] sm:$0xff] %vm124, %v218
    loop: start=0, step=1, limit=2
    $region58: #{tpu_custom_call.1} parent=1 // loop_pre_header
      _
    $region59: #{tpu_custom_call.1} parent=1 // loop_header
      %s223 = sphi 0, %s227
      %p224 = scmp.ge.s32.totalorder %s223, 2
    $region60: #{tpu_custom_call.1} parent=1 // loop_header_branch
      %226 = sbr.rel (%p224) target = $region64
    $region61: #{tpu_custom_call.1} parent=1 // loop_body
      %s228 = smul.u32 %s223, 8
      %s229 = scalar_lea.vmem [#allocation2], %s228
      %v230 = vld [vmem:[%s229] sm:$0xff]
      %s231 = scalar_lea.vmem [#allocation3], %s228
      %v232 = vld [vmem:[%s231] sm:$0xff]
      %s233 = scalar_lea.vmem [#allocation4], %s228
      %v234 = vld [vmem:[%s233] sm:$0xff]
      %vm235 = vcmask 64512
      %v237 = vsel %vm235, %v230, 0
      %v240 = vsel %vm235, %v232, 0
      %242 = vmatpush.xpose.msra.mxu0 0.0
      %243 = vmatpush.xpose.msra.mxu0 0.0
      %244 = vmatpush.xpose.msra.mxu0 0.0
      %245 = vmatpush.xpose.msra.mxu0 0.0
      %246 = vmatpush.xpose.msra.mxu0 0.0
      %247 = vmatpush.xpose.msra.mxu0 0.0
      %248 = vmatpush.xpose.msra.mxu0 0.0
      %249 = vmatpush.xpose.msra.mxu0 0.0
      %250 = vmatpush.xpose.msra.mxu0 0.0
      %251 = vmatpush.xpose.msra.mxu0 0.0
      %252 = vmatpush.xpose.msra.mxu0 0.0
      %253 = vmatpush.xpose.msra.mxu0 0.0
      %254 = vmatpush.xpose.msra.mxu0 0.0
      %255 = vmatpush.xpose.msra.mxu0 0.0
      %256 = vmatpush.xpose.msra.mxu0 0.0
      %257 = vmatpush.xpose.msra.mxu0 %v240
      %258 = vmatmul.f32.gmra.mxu0 %v237
      %v259 = vpop.f32.mrf.mxu0
      %v260 = vadd.f32 0.0, %v259
      %261 = vdwg.mxu0
      %v262 = vsel %vm235, %v260, -inf
      %263 = vmax.xlane.f32.xlu0 %v262
      %v264 = vpop.xlane.xlu0 %263
      %v265 = vsub.f32 %v260, %v264
      %v266 = vmul.f32 %v265, 1.442695
      %v267 = vpow.pop %v266
      %v268 = vsel %vm235, %v267, 0.0
      %269 = vadd.xlane.f32.xlu0 %v268
      %v270 = vpop.xlane.xlu0 %269
      %v271 = vrcp.pop %v270
      %v272 = vmul.f32 %v270, %v271
      %v273 = vsub.f32 1.0, %v272
      %v274 = vmul.f32 %v271, %v273
      %v275 = vadd.f32 %v271, %v274
      %vm276 = vweird.f32 %v270
      %vm277 = vweird.f32 %v271
      %vm278 = vmor %vm276, %vm277
      %v279 = vsel %vm278, %v271, %v275
      %v280 = vand.u32 2147483647, %v270
      %vm281 = vcmp.eq.f32.partialorder %v280, 8.507059e+37
      %v282 = vand.u32 %v270, 2147483648
      %v283 = vor.u32 1.1754944e-38, %v282
      %v284 = vsel %vm281, %v283, %v279
      %v285 = vmul.f32 %v267, %v284
      %v286 = vmul.f32 %v285, 0.25
      %s287 = scalar_lea.vmem [#allocation16], %s228
      %288 = vst.msk [vmem:[%s287] sm:$0xff] %vm235, %v286
      %v290 = vsel %vm235, %v285, 0
      %292 = vmatpush.msra.mxu0 0.0
      %293 = vmatpush.msra.mxu0 0.0
      %294 = vmatpush.msra.mxu0 0.0
      %295 = vmatpush.msra.mxu0 0.0
      %296 = vmatpush.msra.mxu0 0.0
      %297 = vmatpush.msra.mxu0 0.0
      %298 = vmatpush.msra.mxu0 0.0
      %299 = vmatpush.msra.mxu0 0.0
      %300 = vmatpush.msra.mxu0 0.0
      %301 = vmatpush.msra.mxu0 0.0
      %302 = vmatpush.msra.mxu0 0.0
      %303 = vmatpush.msra.mxu0 0.0
      %304 = vmatpush.msra.mxu0 0.0
      %305 = vmatpush.msra.mxu0 0.0
      %306 = vmatpush.msra.mxu0 0.0
      %307 = vmatpush.msra.mxu0 %v234
      %308 = vmatmul.f32.gmra.mxu0 %v290
      %v309 = vpop.f32.mrf.mxu0
      %v310 = vadd.f32 0.0, %v309
      %311 = vdwg.mxu0
      %312 = vst.msk [vmem:[#allocation5] sm:$0xff] %vm235, %v310
      %313 = vrot.lane.b32.xlu0 %v230, 120
      %v314 = vpop.permute.xlu0 %313
      %315 = vrot.lane.b32.xlu0 %v232, 120
      %v316 = vpop.permute.xlu0 %315
      %v317 = vsel %vm235, %v314, 0
      %v319 = vsel %vm235, %v316, 0
      %321 = vmatpush.xpose.msra.mxu0 0.0
      %322 = vmatpush.xpose.msra.mxu0 0.0
      %323 = vmatpush.xpose.msra.mxu0 0.0
      %324 = vmatpush.xpose.msra.mxu0 0.0
      %325 = vmatpush.xpose.msra.mxu0 0.0
      %326 = vmatpush.xpose.msra.mxu0 0.0
      %327 = vmatpush.xpose.msra.mxu0 0.0
      %328 = vmatpush.xpose.msra.mxu0 0.0
      %329 = vmatpush.xpose.msra.mxu0 0.0
      %330 = vmatpush.xpose.msra.mxu0 0.0
      %331 = vmatpush.xpose.msra.mxu0 0.0
      %332 = vmatpush.xpose.msra.mxu0 0.0
      %333 = vmatpush.xpose.msra.mxu0 0.0
      %334 = vmatpush.xpose.msra.mxu0 0.0
      %335 = vmatpush.xpose.msra.mxu0 0.0
      %336 = vmatpush.xpose.msra.mxu0 %v319
      %337 = vmatmul.f32.gmra.mxu0 %v317
      %v338 = vpop.f32.mrf.mxu0
      %v339 = vadd.f32 0.0, %v338
      %340 = vdwg.mxu0
      %v341 = vsel %vm235, %v339, -inf
      %342 = vmax.xlane.f32.xlu0 %v341
      %v343 = vpop.xlane.xlu0 %342
      %v344 = vsub.f32 %v339, %v343
      %v345 = vmul.f32 %v344, 1.442695
      %v346 = vpow.pop %v345
      %v347 = vsel %vm235, %v346, 0.0
      %348 = vadd.xlane.f32.xlu0 %v347
      %v349 = vpop.xlane.xlu0 %348
      %v350 = vrcp.pop %v349
      %v351 = vmul.f32 %v349, %v350
      %v352 = vsub.f32 1.0, %v351
      %v353 = vmul.f32 %v350, %v352
      %v354 = vadd.f32 %v350, %v353
      %vm355 = vweird.f32 %v349
      %vm356 = vweird.f32 %v350
      %vm357 = vmor %vm355, %vm356
      %v358 = vsel %vm357, %v350, %v354
      %v359 = vand.u32 2147483647, %v349
      %vm360 = vcmp.eq.f32.partialorder %v359, 8.507059e+37
      %v361 = vand.u32 %v349, 2147483648
      %v362 = vor.u32 1.1754944e-38, %v361
      %v363 = vsel %vm360, %v362, %v358
      %v364 = vmul.f32 %v346, %v363
      %v365 = vmul.f32 %v364, 0.25
      %v366 = vld [vmem:[%s287] sm:$0xff]
      %v367 = vadd.f32 %v366, %v365
      %368 = vst.msk [vmem:[%s287] sm:$0xff] %vm235, %v367
      %370 = vrot.lane.b32.xlu0 %v234, 120
      %v371 = vpop.permute.xlu0 %370
      %v374 = vsel %vm235, %v364, 0
      %376 = vmatpush.msra.mxu0 0.0
      %377 = vmatpush.msra.mxu0 0.0
      %378 = vmatpush.msra.mxu0 0.0
      %379 = vmatpush.msra.mxu0 0.0
      %380 = vmatpush.msra.mxu0 0.0
      %381 = vmatpush.msra.mxu0 0.0
      %382 = vmatpush.msra.mxu0 0.0
      %383 = vmatpush.msra.mxu0 0.0
      %384 = vmatpush.msra.mxu0 0.0
      %385 = vmatpush.msra.mxu0 0.0
      %386 = vmatpush.msra.mxu0 0.0
      %387 = vmatpush.msra.mxu0 0.0
      %388 = vmatpush.msra.mxu0 0.0
      %389 = vmatpush.msra.mxu0 0.0
      %390 = vmatpush.msra.mxu0 0.0
      %391 = vmatpush.msra.mxu0 %v371
      %392 = vmatmul.f32.gmra.mxu0 %v374
      %v393 = vpop.f32.mrf.mxu0
      %v394 = vadd.f32 0.0, %v393
      %395 = vdwg.mxu0
      %397 = vrot.lane.b32.xlu0 %v394, 8
      %v398 = vpop.permute.xlu0 %397
      %vm400 = vcmask 130112
      %401 = vst.msk [vmem:[#allocation5] sm:$0xff] %vm400, %v398
      %402 = vrot.lane.b32.xlu0 %v230, 112
      %v403 = vpop.permute.xlu0 %402
      %404 = vrot.lane.b32.xlu0 %v232, 112
      %v405 = vpop.permute.xlu0 %404
      %v406 = vsel %vm235, %v403, 0
      %v408 = vsel %vm235, %v405, 0
      %410 = vmatpush.xpose.msra.mxu0 0.0
      %411 = vmatpush.xpose.msra.mxu0 0.0
      %412 = vmatpush.xpose.msra.mxu0 0.0
      %413 = vmatpush.xpose.msra.mxu0 0.0
      %414 = vmatpush.xpose.msra.mxu0 0.0
      %415 = vmatpush.xpose.msra.mxu0 0.0
      %416 = vmatpush.xpose.msra.mxu0 0.0
      %417 = vmatpush.xpose.msra.mxu0 0.0
      %418 = vmatpush.xpose.msra.mxu0 0.0
      %419 = vmatpush.xpose.msra.mxu0 0.0
      %420 = vmatpush.xpose.msra.mxu0 0.0
      %421 = vmatpush.xpose.msra.mxu0 0.0
      %422 = vmatpush.xpose.msra.mxu0 0.0
      %423 = vmatpush.xpose.msra.mxu0 0.0
      %424 = vmatpush.xpose.msra.mxu0 0.0
      %425 = vmatpush.xpose.msra.mxu0 %v408
      %426 = vmatmul.f32.gmra.mxu0 %v406
      %v427 = vpop.f32.mrf.mxu0
      %v428 = vadd.f32 0.0, %v427
      %429 = vdwg.mxu0
      %v430 = vsel %vm235, %v428, -inf
      %431 = vmax.xlane.f32.xlu0 %v430
      %v432 = vpop.xlane.xlu0 %431
      %v433 = vsub.f32 %v428, %v432
      %v434 = vmul.f32 %v433, 1.442695
      %v435 = vpow.pop %v434
      %v436 = vsel %vm235, %v435, 0.0
      %437 = vadd.xlane.f32.xlu0 %v436
      %v438 = vpop.xlane.xlu0 %437
      %v439 = vrcp.pop %v438
      %v440 = vmul.f32 %v438, %v439
      %v441 = vsub.f32 1.0, %v440
      %v442 = vmul.f32 %v439, %v441
      %v443 = vadd.f32 %v439, %v442
      %vm444 = vweird.f32 %v438
      %vm445 = vweird.f32 %v439
      %vm446 = vmor %vm444, %vm445
      %v447 = vsel %vm446, %v439, %v443
      %v448 = vand.u32 2147483647, %v438
      %vm449 = vcmp.eq.f32.partialorder %v448, 8.507059e+37
      %v450 = vand.u32 %v438, 2147483648
      %v451 = vor.u32 1.1754944e-38, %v450
      %v452 = vsel %vm449, %v451, %v447
      %v453 = vmul.f32 %v435, %v452
      %v454 = vmul.f32 %v453, 0.25
      %v455 = vld [vmem:[%s287] sm:$0xff]
      %v456 = vadd.f32 %v455, %v454
      %457 = vst.msk [vmem:[%s287] sm:$0xff] %vm235, %v456
      %458 = vrot.lane.b32.xlu0 %v234, 112
      %v459 = vpop.permute.xlu0 %458
      %v462 = vsel %vm235, %v453, 0
      %464 = vmatpush.msra.mxu0 0.0
      %465 = vmatpush.msra.mxu0 0.0
      %466 = vmatpush.msra.mxu0 0.0
      %467 = vmatpush.msra.mxu0 0.0
      %468 = vmatpush.msra.mxu0 0.0
      %469 = vmatpush.msra.mxu0 0.0
      %470 = vmatpush.msra.mxu0 0.0
      %471 = vmatpush.msra.mxu0 0.0
      %472 = vmatpush.msra.mxu0 0.0
      %473 = vmatpush.msra.mxu0 0.0
      %474 = vmatpush.msra.mxu0 0.0
      %475 = vmatpush.msra.mxu0 0.0
      %476 = vmatpush.msra.mxu0 0.0
      %477 = vmatpush.msra.mxu0 0.0
      %478 = vmatpush.msra.mxu0 0.0
      %479 = vmatpush.msra.mxu0 %v459
      %480 = vmatmul.f32.gmra.mxu0 %v462
      %v481 = vpop.f32.mrf.mxu0
      %v482 = vadd.f32 0.0, %v481
      %483 = vdwg.mxu0
      %485 = vrot.lane.b32.xlu0 %v482, 16
      %v486 = vpop.permute.xlu0 %485
      %vm488 = vcmask 195712
      %489 = vst.msk [vmem:[#allocation5] sm:$0xff] %vm488, %v486
      %490 = vrot.lane.b32.xlu0 %v230, 104
      %v491 = vpop.permute.xlu0 %490
      %492 = vrot.lane.b32.xlu0 %v232, 104
      %v493 = vpop.permute.xlu0 %492
      %v494 = vsel %vm235, %v491, 0
      %v496 = vsel %vm235, %v493, 0
      %498 = vmatpush.xpose.msra.mxu0 0.0
      %499 = vmatpush.xpose.msra.mxu0 0.0
      %500 = vmatpush.xpose.msra.mxu0 0.0
      %501 = vmatpush.xpose.msra.mxu0 0.0
      %502 = vmatpush.xpose.msra.mxu0 0.0
      %503 = vmatpush.xpose.msra.mxu0 0.0
      %504 = vmatpush.xpose.msra.mxu0 0.0
      %505 = vmatpush.xpose.msra.mxu0 0.0
      %506 = vmatpush.xpose.msra.mxu0 0.0
      %507 = vmatpush.xpose.msra.mxu0 0.0
      %508 = vmatpush.xpose.msra.mxu0 0.0
      %509 = vmatpush.xpose.msra.mxu0 0.0
      %510 = vmatpush.xpose.msra.mxu0 0.0
      %511 = vmatpush.xpose.msra.mxu0 0.0
      %512 = vmatpush.xpose.msra.mxu0 0.0
      %513 = vmatpush.xpose.msra.mxu0 %v496
      %514 = vmatmul.f32.gmra.mxu0 %v494
      %v515 = vpop.f32.mrf.mxu0
      %v516 = vadd.f32 0.0, %v515
      %517 = vdwg.mxu0
      %v518 = vsel %vm235, %v516, -inf
      %519 = vmax.xlane.f32.xlu0 %v518
      %v520 = vpop.xlane.xlu0 %519
      %v521 = vsub.f32 %v516, %v520
      %v522 = vmul.f32 %v521, 1.442695
      %v523 = vpow.pop %v522
      %v524 = vsel %vm235, %v523, 0.0
      %525 = vadd.xlane.f32.xlu0 %v524
      %v526 = vpop.xlane.xlu0 %525
      %v527 = vrcp.pop %v526
      %v528 = vmul.f32 %v526, %v527
      %v529 = vsub.f32 1.0, %v528
      %v530 = vmul.f32 %v527, %v529
      %v531 = vadd.f32 %v527, %v530
      %vm532 = vweird.f32 %v526
      %vm533 = vweird.f32 %v527
      %vm534 = vmor %vm532, %vm533
      %v535 = vsel %vm534, %v527, %v531
      %v536 = vand.u32 2147483647, %v526
      %vm537 = vcmp.eq.f32.partialorder %v536, 8.507059e+37
      %v538 = vand.u32 %v526, 2147483648
      %v539 = vor.u32 1.1754944e-38, %v538
      %v540 = vsel %vm537, %v539, %v535
      %v541 = vmul.f32 %v523, %v540
      %v542 = vmul.f32 %v541, 0.25
      %v543 = vld [vmem:[%s287] sm:$0xff]
      %v544 = vadd.f32 %v543, %v542
      %545 = vst.msk [vmem:[%s287] sm:$0xff] %vm235, %v544
      %546 = vrot.lane.b32.xlu0 %v234, 104
      %v547 = vpop.permute.xlu0 %546
      %v550 = vsel %vm235, %v541, 0
      %552 = vmatpush.msra.mxu0 0.0
      %553 = vmatpush.msra.mxu0 0.0
      %554 = vmatpush.msra.mxu0 0.0
      %555 = vmatpush.msra.mxu0 0.0
      %556 = vmatpush.msra.mxu0 0.0
      %557 = vmatpush.msra.mxu0 0.0
      %558 = vmatpush.msra.mxu0 0.0
      %559 = vmatpush.msra.mxu0 0.0
      %560 = vmatpush.msra.mxu0 0.0
      %561 = vmatpush.msra.mxu0 0.0
      %562 = vmatpush.msra.mxu0 0.0
      %563 = vmatpush.msra.mxu0 0.0
      %564 = vmatpush.msra.mxu0 0.0
      %565 = vmatpush.msra.mxu0 0.0
      %566 = vmatpush.msra.mxu0 0.0
      %567 = vmatpush.msra.mxu0 %v547
      %568 = vmatmul.f32.gmra.mxu0 %v550
      %v569 = vpop.f32.mrf.mxu0
      %v570 = vadd.f32 0.0, %v569
      %571 = vdwg.mxu0
      %573 = vrot.lane.b32.xlu0 %v570, 24
      %v574 = vpop.permute.xlu0 %573
      %vm576 = vcmask 261312
      %577 = vst.msk [vmem:[#allocation5] sm:$0xff] %vm576, %v574
      %v578 = vld [vmem:[#allocation5] sm:$0xff]
      %v579 = vld [vmem:[#allocation14] sm:$0xff]
      %v580 = vld [vmem:[#allocation14 + $0x8] sm:$0xff]
      %v581 = vld [vmem:[#allocation14 + $0x10] sm:$0xff]
      %v582 = vld [vmem:[#allocation14 + $0x18] sm:$0xff]
      %v583 = vld [vmem:[%s8] sm:$0x1]
      %v585 = vperm.slane %v583, 0
      %v588 = vsel %vm124, %v578, 0
      %590 = vmatpush.msra.mxu0 0.0
      %591 = vmatpush.msra.mxu0 0.0
      %592 = vmatpush.msra.mxu0 0.0
      %593 = vmatpush.msra.mxu0 0.0
      %594 = vmatpush.msra.mxu0 0.0
      %595 = vmatpush.msra.mxu0 0.0
      %596 = vmatpush.msra.mxu0 0.0
      %597 = vmatpush.msra.mxu0 0.0
      %598 = vmatpush.msra.mxu0 0.0
      %599 = vmatpush.msra.mxu0 0.0
      %600 = vmatpush.msra.mxu0 0.0
      %601 = vmatpush.msra.mxu0 0.0
      %602 = vmatpush.msra.mxu0 %v582
      %603 = vmatpush.msra.mxu0 %v581
      %604 = vmatpush.msra.mxu0 %v580
      %605 = vmatpush.msra.mxu0 %v579
      %606 = vmatmul.f32.gmra.mxu0 %v588
      %v607 = vpop.f32.mrf.mxu0
      %v608 = vadd.f32 %v585, %v607
      %609 = vdwg.mxu0
      %s610 = scalar_lea.vmem [#allocation15], %s228
      %611 = vst.msk [vmem:[%s610] sm:$0xff] %vm124, %v608
    $region62: #{tpu_custom_call.1} parent=1 // loop_footer
      %s227 = sadd.s32 1, %s223
    $region63: #{tpu_custom_call.1} parent=1 // loop_footer_branch
      %222 = sbr.rel target = $region59
    $region64: #{tpu_custom_call.1} parent=1 // loop_exit
      _
    // Predicated region
    $region65: #{tpu_custom_call.1} parent=1 // pred_check
      _
    $region66: #{tpu_custom_call.1} parent=1 // pred_check_branch
      %613 = sbr.rel (0) target = $region68
    $region67: #{tpu_custom_call.1} parent=1 // pred_region
      %615 = vsyncadd [#allocation8], 0
      %s616 = sshll.u32 [#allocation15], 4
      %s617 = int_to_ptr.vmem [resolvable:$true] %s616
      %s618 = sshll.u32 %s9, 4
      %s619 = int_to_ptr.hbm [resolvable:$true] %s618
      %624 = dma.vmem_to_hbm [thread:$0]  %s617, 256, %s619, [#allocation8], 128, 128, 8
    $region68: #{tpu_custom_call.1} parent=1 // pred_fallthru
      _
    // Predicated region
    $region69: #{tpu_custom_call.1} parent=1 // pred_check
      _
    $region70: #{tpu_custom_call.1} parent=1 // pred_check_branch
      %626 = sbr.rel (0) target = $region72
    $region71: #{tpu_custom_call.1} parent=1 // pred_region
      %628 = vsyncadd [#allocation17], 0
      %s629 = sshll.u32 [#allocation16], 4
      %s630 = int_to_ptr.vmem [resolvable:$true] %s629
      %s631 = sshll.u32 %s10, 4
      %s632 = int_to_ptr.hbm [resolvable:$true] %s631
      %637 = dma.vmem_to_hbm [thread:$0]  %s630, 256, %s632, [#allocation17], 128, 128, 8
    $region72: #{tpu_custom_call.1} parent=1 // pred_fallthru
      _
    // Predicated region
    $region73: #{tpu_custom_call.1} parent=1 // pred_check
      _
    $region74: #{tpu_custom_call.1} parent=1 // pred_check_branch
      %639 = sbr.rel (0) target = $region76
    $region75: #{tpu_custom_call.1} parent=1 // pred_region
      %641 = dma.done [#allocation8], 256
    $region76: #{tpu_custom_call.1} parent=1 // pred_fallthru
      _
    // Predicated region
    $region77: #{tpu_custom_call.1} parent=1 // pred_check
      _
    $region78: #{tpu_custom_call.1} parent=1 // pred_check_branch
      %643 = sbr.rel (0) target = $region80
    $region79: #{tpu_custom_call.1} parent=1 // pred_region
      %645 = dma.done [#allocation17], 256
    $region80: #{tpu_custom_call.1} parent=1 // pred_fallthru
      _
    %646 = vsyncpa [#allocation7], 1
    %647 = vsyncpa [#allocation10], 1
    %648 = vsyncpa [#allocation13], 1
    %649 = vsyncpa [#allocation8], 1
    %650 = vsyncpa [#allocation17], 1

// kernel: tpu_custom_call.1
$region0: #{tpu_custom_call.1}
  #allocation0 [shape = 'u32[]', space=smem, size = 0x4, offset = 0x4, fixed_abs, tag = 'smem constant byte address 0x4 - core index']
  #allocation1 [shape = 'u32[72,128]{1,0:T(1,128)}', space=vmem, size = 0x9000, scoped, tag = 'internal scratch']
  #allocation2 [shape = 'f32[2,8,32]{2,1,0:T(8,128)}', space=vmem, size = 0x2000, scoped, tag = 'scratch operand']
  #allocation3 [shape = 'f32[2,8,32]{2,1,0:T(8,128)}', space=vmem, size = 0x2000, scoped, tag = 'scratch operand']
  #allocation4 [shape = 'f32[2,8,32]{2,1,0:T(8,128)}', space=vmem, size = 0x2000, scoped, tag = 'scratch operand']
  #allocation5 [shape = 'f32[8,32]{1,0:T(8,128)}', space=vmem, size = 0x1000, scoped, tag = 'scratch operand']
  %s0 = inlined_call_operand.hbm [shape: f32[2,8,32], index: 0, kind: input, shape index: {}]
  %s1 = inlined_call_operand.hbm [shape: f32[32,32], index: 1, kind: input, shape index: {}]
  %s2 = inlined_call_operand.vmem [shape: f32[1,32], index: 2, kind: input, shape index: {}]
  %s3 = inlined_call_operand.hbm [shape: f32[32,32], index: 3, kind: input, shape index: {}]
  %s4 = inlined_call_operand.vmem [shape: f32[1,32], index: 4, kind: input, shape index: {}]
  %s5 = inlined_call_operand.hbm [shape: f32[32,32], index: 5, kind: input, shape index: {}]
  %s6 = inlined_call_operand.vmem [shape: f32[1,32], index: 6, kind: input, shape index: {}]
  %s7 = inlined_call_operand.hbm [shape: f32[32,32], index: 7, kind: input, shape index: {}]
  %s8 = inlined_call_operand.vmem [shape: f32[1,32], index: 8, kind: input, shape index: {}]
  %s9 = inlined_call_operand.hbm [shape: f32[2,8,32], index: 9, kind: output, shape index: {0}]
  %s10 = inlined_call_operand.hbm [shape: f32[2,8,8], index: 10, kind: output, shape index: {1}]
  %11 = xla_tuple %s9, %s10
  %s12 = sld [smem:[#allocation0]]
  $region81: #{tpu_custom_call.1} parent=0
    _
  %s14 = ssub.s32 1, %s12
  %s15 = scalar_select 0, %s14, %s12
  $region1: #{tpu_custom_call.1} parent=0
    #allocation6 [shape = 'u8[8192]{0}', space=vmem, size = 0x2000, scoped, tag = 'input window, operand 0, single buffered']
    #allocation7 [shape = 's32[1]{0}', space=sflag, size = 0x4, scoped, tag = 'scoped memory for tpu_custom_call.1']
    #allocation8 [shape = 's32[1]{0}', space=sflag, size = 0x4, scoped, tag = 'scoped memory for tpu_custom_call.1']
    #allocation9 [shape = 'u8[16384]{0}', space=vmem, size = 0x4000, scoped, tag = 'input window, operand 1, single buffered']
    #allocation10 [shape = 's32[1]{0}', space=sflag, size = 0x4, scoped, tag = 'scoped memory for tpu_custom_call.1']
    #allocation11 [shape = 'u8[16384]{0}', space=vmem, size = 0x4000, scoped, tag = 'input window, operand 3, single buffered']
    #allocation12 [shape = 'u8[16384]{0}', space=vmem, size = 0x4000, scoped, tag = 'input window, operand 5, single buffered']
    #allocation13 [shape = 's32[1]{0}', space=sflag, size = 0x4, scoped, tag = 'scoped memory for tpu_custom_call.1']
    #allocation14 [shape = 'u8[16384]{0}', space=vmem, size = 0x4000, scoped, tag = 'input window, operand 7, single buffered']
    #allocation15 [shape = 'u8[8192]{0}', space=vmem, size = 0x2000, scoped, tag = 'output window, operand 0, single buffered']
    #allocation16 [shape = 'u8[8192]{0}', space=vmem, size = 0x2000, scoped, tag = 'output window, operand 1, single buffered']
    #allocation17 [shape = 's32[1]{0}', space=sflag, size = 0x4, scoped, tag = 'scoped memory for tpu_custom_call.1']
    %16 = vsyncpa [#allocation7], 0
    %17 = vsyncpa [#allocation10], 0
    %18 = vsyncpa [#allocation13], 0
    %19 = vsyncpa [#allocation8], 0
    %20 = vsyncpa [#allocation17], 0
    // Predicated region
    $region2: #{tpu_custom_call.1} parent=1 // pred_check
      _
    $region3: #{tpu_custom_call.1} parent=1 // pred_check_branch
      %22 = sbr.rel (0) target = $region5
    $region4: #{tpu_custom_call.1} parent=1 // pred_region
      %24 = vsyncadd [#allocation7], 0
      %s25 = sshll.u32 %s0, 4
      %s26 = int_to_ptr.hbm [resolvable:$true] %s25
      %s27 = sshll.u32 [#allocation6], 4
      %s28 = int_to_ptr.vmem [resolvable:$true] %s27
      %33 = dma.hbm_to_vmem [thread:$0]  %s26, 256, %s28, [#allocation7], 128, 128, 8
    $region5: #{tpu_custom_call.1} parent=1 // pred_fallthru
      _
    // Predicated region
    $region6: #{tpu_custom_call.1} parent=1 // pred_check
      _
    $region7: #{tpu_custom_call.1} parent=1 // pred_check_branch
      %35 = sbr.rel (0) target = $region9
    $region8: #{tpu_custom_call.1} parent=1 // pred_region
      %37 = vsyncadd [#allocation10], 0
      %s38 = sshll.u32 %s1, 4
      %s39 = int_to_ptr.hbm [resolvable:$true] %s38
      %s40 = sshll.u32 [#allocation9], 4
      %s41 = int_to_ptr.vmem [resolvable:$true] %s40
      %46 = dma.hbm_to_vmem [thread:$0]  %s39, 512, %s41, [#allocation10], 128, 128, 8
    $region9: #{tpu_custom_call.1} parent=1 // pred_fallthru
      _
    // Predicated region
    $region10: #{tpu_custom_call.1} parent=1 // pred_check
      _
    $region11: #{tpu_custom_call.1} parent=1 // pred_check_branch
      %48 = sbr.rel (0) target = $region13
    $region12: #{tpu_custom_call.1} parent=1 // pred_region
      _
    $region13: #{tpu_custom_call.1} parent=1 // pred_fallthru
      _
    // Predicated region
    $region14: #{tpu_custom_call.1} parent=1 // pred_check
      _
    $region15: #{tpu_custom_call.1} parent=1 // pred_check_branch
      %50 = sbr.rel (0) target = $region17
    $region16: #{tpu_custom_call.1} parent=1 // pred_region
      %52 = vsyncadd [#allocation10], 0
      %s53 = sshll.u32 %s3, 4
      %s54 = int_to_ptr.hbm [resolvable:$true] %s53
      %s55 = sshll.u32 [#allocation11], 4
      %s56 = int_to_ptr.vmem [resolvable:$true] %s55
      %61 = dma.hbm_to_vmem [thread:$0]  %s54, 512, %s56, [#allocation10], 128, 128, 8
    $region17: #{tpu_custom_call.1} parent=1 // pred_fallthru
      _
    // Predicated region
    $region18: #{tpu_custom_call.1} parent=1 // pred_check
      _
    $region19: #{tpu_custom_call.1} parent=1 // pred_check_branch
      %63 = sbr.rel (0) target = $region21
    $region20: #{tpu_custom_call.1} parent=1 // pred_region
      _
    $region21: #{tpu_custom_call.1} parent=1 // pred_fallthru
      _
    // Predicated region
    $region22: #{tpu_custom_call.1} parent=1 // pred_check
      _
    $region23: #{tpu_custom_call.1} parent=1 // pred_check_branch
      %65 = sbr.rel (0) target = $region25
    $region24: #{tpu_custom_call.1} parent=1 // pred_region
      %67 = vsyncadd [#allocation13], 0
      %s68 = sshll.u32 %s5, 4
      %s69 = int_to_ptr.hbm [resolvable:$true] %s68
      %s70 = sshll.u32 [#allocation12], 4
      %s71 = int_to_ptr.vmem [resolvable:$true] %s70
      %76 = dma.hbm_to_vmem [thread:$0]  %s69, 512, %s71, [#allocation13], 128, 128, 8
    $region25: #{tpu_custom_call.1} parent=1 // pred_fallthru
      _
    // Predicated region
    $region26: #{tpu_custom_call.1} parent=1 // pred_check
      _
    $region27: #{tpu_custom_call.1} parent=1 // pred_check_branch
      %78 = sbr.rel (0) target = $region29
    $region28: #{tpu_custom_call.1} parent=1 // pred_region
      _
    $region29: #{tpu_custom_call.1} parent=1 // pred_fallthru
      _
    // Predicated region
    $region30: #{tpu_custom_call.1} parent=1 // pred_check
      _
    $region31: #{tpu_custom_call.1} parent=1 // pred_check_branch
      %80 = sbr.rel (0) target = $region33
    $region32: #{tpu_custom_call.1} parent=1 // pred_region
      %82 = vsyncadd [#allocation13], 0
      %s83 = sshll.u32 %s7, 4
      %s84 = int_to_ptr.hbm [resolvable:$true] %s83
      %s85 = sshll.u32 [#allocation14], 4
      %s86 = int_to_ptr.vmem [resolvable:$true] %s85
      %91 = dma.hbm_to_vmem [thread:$0]  %s84, 512, %s86, [#allocation13], 128, 128, 8
    $region33: #{tpu_custom_call.1} parent=1 // pred_fallthru
      _
    // Predicated region
    $region34: #{tpu_custom_call.1} parent=1 // pred_check
      _
    $region35: #{tpu_custom_call.1} parent=1 // pred_check_branch
      %93 = sbr.rel (0) target = $region37
    $region36: #{tpu_custom_call.1} parent=1 // pred_region
      _
    $region37: #{tpu_custom_call.1} parent=1 // pred_fallthru
      _
    // Predicated region
    $region38: #{tpu_custom_call.1} parent=1 // pred_check
      _
    $region39: #{tpu_custom_call.1} parent=1 // pred_check_branch
      %95 = sbr.rel (0) target = $region41
    $region40: #{tpu_custom_call.1} parent=1 // pred_region
      %97 = dma.done [#allocation7], 256
    $region41: #{tpu_custom_call.1} parent=1 // pred_fallthru
      _
    // Predicated region
    $region42: #{tpu_custom_call.1} parent=1 // pred_check
      _
    $region43: #{tpu_custom_call.1} parent=1 // pred_check_branch
      %99 = sbr.rel (0) target = $region45
    $region44: #{tpu_custom_call.1} parent=1 // pred_region
      %101 = dma.done [#allocation10], 512
    $region45: #{tpu_custom_call.1} parent=1 // pred_fallthru
      _
    // Predicated region
    $region46: #{tpu_custom_call.1} parent=1 // pred_check
      _
    $region47: #{tpu_custom_call.1} parent=1 // pred_check_branch
      %103 = sbr.rel (0) target = $region49
    $region48: #{tpu_custom_call.1} parent=1 // pred_region
      %105 = dma.done [#allocation10], 512
    $region49: #{tpu_custom_call.1} parent=1 // pred_fallthru
      _
    // Predicated region
    $region50: #{tpu_custom_call.1} parent=1 // pred_check
      _
    $region51: #{tpu_custom_call.1} parent=1 // pred_check_branch
      %107 = sbr.rel (0) target = $region53
    $region52: #{tpu_custom_call.1} parent=1 // pred_region
      %109 = dma.done [#allocation13], 512
    $region53: #{tpu_custom_call.1} parent=1 // pred_fallthru
      _
    // Predicated region
    $region54: #{tpu_custom_call.1} parent=1 // pred_check
      _
    $region55: #{tpu_custom_call.1} parent=1 // pred_check_branch
      %111 = sbr.rel (0) target = $region57
    $region56: #{tpu_custom_call.1} parent=1 // pred_region
      %113 = dma.done [#allocation13], 512
    $region57: #{tpu_custom_call.1} parent=1 // pred_fallthru
      _
    %v114 = vld [vmem:[#allocation6] sm:$0xff]
    %v115 = vld [vmem:[#allocation6 + $0x8] sm:$0xff]
    %v116 = vld [vmem:[#allocation9] sm:$0xff]
    %v117 = vld [vmem:[#allocation9 + $0x8] sm:$0xff]
    %v118 = vld [vmem:[#allocation9 + $0x10] sm:$0xff]
    %v119 = vld [vmem:[#allocation9 + $0x18] sm:$0xff]
    %v120 = vld [vmem:[%s2] sm:$0x1]
    %v122 = vperm.slane %v120, 0
    %vm124 = vcmask 261120
    %v126 = vsel %vm124, %v114, 0
    %v129 = vsel %vm124, %v115, 0
    %131 = vmatpush.msra.mxu0 0.0
    %132 = vmatpush.msra.mxu0 0.0
    %133 = vmatpush.msra.mxu0 0.0
    %134 = vmatpush.msra.mxu0 0.0
    %135 = vmatpush.msra.mxu0 0.0
    %136 = vmatpush.msra.mxu0 0.0
    %137 = vmatpush.msra.mxu0 0.0
    %138 = vmatpush.msra.mxu0 0.0
    %139 = vmatpush.msra.mxu0 0.0
    %140 = vmatpush.msra.mxu0 0.0
    %141 = vmatpush.msra.mxu0 0.0
    %142 = vmatpush.msra.mxu0 0.0
    %143 = vmatpush.msra.mxu0 %v119
    %144 = vmatpush.msra.mxu0 %v118
    %145 = vmatpush.msra.mxu0 %v117
    %146 = vmatpush.msra.mxu0 %v116
    %147 = vmatmul.f32.gmra.mxu0 %v126
    %v148 = vpop.f32.mrf.mxu0
    %v149 = vadd.f32 %v122, %v148
    %150 = vmatmul.f32.gmra.mxu0 %v129
    %v151 = vpop.f32.mrf.mxu0
    %v152 = vadd.f32 %v122, %v151
    %153 = vdwg.mxu0
    %154 = vst.msk [vmem:[#allocation2] sm:$0xff] %vm124, %v149
    %155 = vst.msk [vmem:[#allocation2 + $0x8] sm:$0xff] %vm124, %v152
    %v156 = vld [vmem:[#allocation11] sm:$0xff]
    %v157 = vld [vmem:[#allocation11 + $0x8] sm:$0xff]
    %v158 = vld [vmem:[#allocation11 + $0x10] sm:$0xff]
    %v159 = vld [vmem:[#allocation11 + $0x18] sm:$0xff]
    %v160 = vld [vmem:[%s4] sm:$0x1]
    %v162 = vperm.slane %v160, 0
    %164 = vmatpush.msra.mxu0 0.0
    %165 = vmatpush.msra.mxu0 0.0
    %166 = vmatpush.msra.mxu0 0.0
    %167 = vmatpush.msra.mxu0 0.0
    %168 = vmatpush.msra.mxu0 0.0
    %169 = vmatpush.msra.mxu0 0.0
    %170 = vmatpush.msra.mxu0 0.0
    %171 = vmatpush.msra.mxu0 0.0
    %172 = vmatpush.msra.mxu0 0.0
    %173 = vmatpush.msra.mxu0 0.0
    %174 = vmatpush.msra.mxu0 0.0
    %175 = vmatpush.msra.mxu0 0.0
    %176 = vmatpush.msra.mxu0 %v159
    %177 = vmatpush.msra.mxu0 %v158
    %178 = vmatpush.msra.mxu0 %v157
    %179 = vmatpush.msra.mxu0 %v156
    %180 = vmatmul.f32.gmra.mxu0 %v126
    %v181 = vpop.f32.mrf.mxu0
    %v182 = vadd.f32 %v162, %v181
    %183 = vmatmul.f32.gmra.mxu0 %v129
    %v184 = vpop.f32.mrf.mxu0
    %v185 = vadd.f32 %v162, %v184
    %186 = vdwg.mxu0
    %187 = vst.msk [vmem:[#allocation3] sm:$0xff] %vm124, %v182
    %188 = vst.msk [vmem:[#allocation3 + $0x8] sm:$0xff] %vm124, %v185
    %v189 = vld [vmem:[#allocation12] sm:$0xff]
    %v190 = vld [vmem:[#allocation12 + $0x8] sm:$0xff]
    %v191 = vld [vmem:[#allocation12 + $0x10] sm:$0xff]
    %v192 = vld [vmem:[#allocation12 + $0x18] sm:$0xff]
    %v193 = vld [vmem:[%s6] sm:$0x1]
    %v195 = vperm.slane %v193, 0
    %197 = vmatpush.msra.mxu0 0.0
    %198 = vmatpush.msra.mxu0 0.0
    %199 = vmatpush.msra.mxu0 0.0
    %200 = vmatpush.msra.mxu0 0.0
    %201 = vmatpush.msra.mxu0 0.0
    %202 = vmatpush.msra.mxu0 0.0
    %203 = vmatpush.msra.mxu0 0.0
    %204 = vmatpush.msra.mxu0 0.0
    %205 = vmatpush.msra.mxu0 0.0
    %206 = vmatpush.msra.mxu0 0.0
    %207 = vmatpush.msra.mxu0 0.0
    %208 = vmatpush.msra.mxu0 0.0
    %209 = vmatpush.msra.mxu0 %v192
    %210 = vmatpush.msra.mxu0 %v191
    %211 = vmatpush.msra.mxu0 %v190
    %212 = vmatpush.msra.mxu0 %v189
    %213 = vmatmul.f32.gmra.mxu0 %v126
    %v214 = vpop.f32.mrf.mxu0
    %v215 = vadd.f32 %v195, %v214
    %216 = vmatmul.f32.gmra.mxu0 %v129
    %v217 = vpop.f32.mrf.mxu0
    %v218 = vadd.f32 %v195, %v217
    %219 = vdwg.mxu0
    %220 = vst.msk [vmem:[#allocation4] sm:$0xff] %vm124, %v215
    %221 = vst.msk [vmem:[#allocation4 + $0x8] sm:$0xff] %vm124, %v218
    loop: start=0, step=1, limit=2
    $region58: #{tpu_custom_call.1} parent=1 // loop_pre_header
      _
    $region59: #{tpu_custom_call.1} parent=1 // loop_header
      %s223 = sphi 0, %s227
      %p224 = scmp.ge.s32.totalorder %s223, 2
    $region60: #{tpu_custom_call.1} parent=1 // loop_header_branch
      %226 = sbr.rel (%p224) target = $region64
    $region61: #{tpu_custom_call.1} parent=1 // loop_body
      %s228 = smul.u32 %s223, 8
      %s229 = scalar_lea.vmem [#allocation2], %s228
      %v230 = vld [vmem:[%s229] sm:$0xff]
      %s231 = scalar_lea.vmem [#allocation3], %s228
      %v232 = vld [vmem:[%s231] sm:$0xff]
      %s233 = scalar_lea.vmem [#allocation4], %s228
      %v234 = vld [vmem:[%s233] sm:$0xff]
      %vm235 = vcmask 64512
      %v237 = vsel %vm235, %v230, 0
      %v240 = vsel %vm235, %v232, 0
      %242 = vmatpush.xpose.msra.mxu0 0.0
      %243 = vmatpush.xpose.msra.mxu0 0.0
      %244 = vmatpush.xpose.msra.mxu0 0.0
      %245 = vmatpush.xpose.msra.mxu0 0.0
      %246 = vmatpush.xpose.msra.mxu0 0.0
      %247 = vmatpush.xpose.msra.mxu0 0.0
      %248 = vmatpush.xpose.msra.mxu0 0.0
      %249 = vmatpush.xpose.msra.mxu0 0.0
      %250 = vmatpush.xpose.msra.mxu0 0.0
      %251 = vmatpush.xpose.msra.mxu0 0.0
      %252 = vmatpush.xpose.msra.mxu0 0.0
      %253 = vmatpush.xpose.msra.mxu0 0.0
      %254 = vmatpush.xpose.msra.mxu0 0.0
      %255 = vmatpush.xpose.msra.mxu0 0.0
      %256 = vmatpush.xpose.msra.mxu0 0.0
      %257 = vmatpush.xpose.msra.mxu0 %v240
      %258 = vmatmul.f32.gmra.mxu0 %v237
      %v259 = vpop.f32.mrf.mxu0
      %v260 = vadd.f32 0.0, %v259
      %261 = vdwg.mxu0
      %v262 = vsel %vm235, %v260, -inf
      %263 = vmax.xlane.f32.xlu0 %v262
      %v264 = vpop.xlane.xlu0 %263
      %v265 = vsub.f32 %v260, %v264
      %v266 = vmul.f32 %v265, 1.442695
      %v267 = vpow.pop %v266
      %v268 = vsel %vm235, %v267, 0.0
      %269 = vadd.xlane.f32.xlu0 %v268
      %v270 = vpop.xlane.xlu0 %269
      %v271 = vrcp.pop %v270
      %v272 = vmul.f32 %v270, %v271
      %v273 = vsub.f32 1.0, %v272
      %v274 = vmul.f32 %v271, %v273
      %v275 = vadd.f32 %v271, %v274
      %vm276 = vweird.f32 %v270
      %vm277 = vweird.f32 %v271
      %vm278 = vmor %vm276, %vm277
      %v279 = vsel %vm278, %v271, %v275
      %v280 = vand.u32 2147483647, %v270
      %vm281 = vcmp.eq.f32.partialorder %v280, 8.507059e+37
      %v282 = vand.u32 %v270, 2147483648
      %v283 = vor.u32 1.1754944e-38, %v282
      %v284 = vsel %vm281, %v283, %v279
      %v285 = vmul.f32 %v267, %v284
      %v286 = vmul.f32 %v285, 0.25
      %s287 = scalar_lea.vmem [#allocation16], %s228
      %288 = vst.msk [vmem:[%s287] sm:$0xff] %vm235, %v286
      %v290 = vsel %vm235, %v285, 0
      %292 = vmatpush.msra.mxu0 0.0
      %293 = vmatpush.msra.mxu0 0.0
      %294 = vmatpush.msra.mxu0 0.0
      %295 = vmatpush.msra.mxu0 0.0
      %296 = vmatpush.msra.mxu0 0.0
      %297 = vmatpush.msra.mxu0 0.0
      %298 = vmatpush.msra.mxu0 0.0
      %299 = vmatpush.msra.mxu0 0.0
      %300 = vmatpush.msra.mxu0 0.0
      %301 = vmatpush.msra.mxu0 0.0
      %302 = vmatpush.msra.mxu0 0.0
      %303 = vmatpush.msra.mxu0 0.0
      %304 = vmatpush.msra.mxu0 0.0
      %305 = vmatpush.msra.mxu0 0.0
      %306 = vmatpush.msra.mxu0 0.0
      %307 = vmatpush.msra.mxu0 %v234
      %308 = vmatmul.f32.gmra.mxu0 %v290
      %v309 = vpop.f32.mrf.mxu0
      %v310 = vadd.f32 0.0, %v309
      %311 = vdwg.mxu0
      %312 = vst.msk [vmem:[#allocation5] sm:$0xff] %vm235, %v310
      %313 = vrot.lane.b32.xlu0 %v230, 120
      %v314 = vpop.permute.xlu0 %313
      %315 = vrot.lane.b32.xlu0 %v232, 120
      %v316 = vpop.permute.xlu0 %315
      %v317 = vsel %vm235, %v314, 0
      %v319 = vsel %vm235, %v316, 0
      %321 = vmatpush.xpose.msra.mxu0 0.0
      %322 = vmatpush.xpose.msra.mxu0 0.0
      %323 = vmatpush.xpose.msra.mxu0 0.0
      %324 = vmatpush.xpose.msra.mxu0 0.0
      %325 = vmatpush.xpose.msra.mxu0 0.0
      %326 = vmatpush.xpose.msra.mxu0 0.0
      %327 = vmatpush.xpose.msra.mxu0 0.0
      %328 = vmatpush.xpose.msra.mxu0 0.0
      %329 = vmatpush.xpose.msra.mxu0 0.0
      %330 = vmatpush.xpose.msra.mxu0 0.0
      %331 = vmatpush.xpose.msra.mxu0 0.0
      %332 = vmatpush.xpose.msra.mxu0 0.0
      %333 = vmatpush.xpose.msra.mxu0 0.0
      %334 = vmatpush.xpose.msra.mxu0 0.0
      %335 = vmatpush.xpose.msra.mxu0 0.0
      %336 = vmatpush.xpose.msra.mxu0 %v319
      %337 = vmatmul.f32.gmra.mxu0 %v317
      %v338 = vpop.f32.mrf.mxu0
      %v339 = vadd.f32 0.0, %v338
      %340 = vdwg.mxu0
      %v341 = vsel %vm235, %v339, -inf
      %342 = vmax.xlane.f32.xlu0 %v341
      %v343 = vpop.xlane.xlu0 %342
      %v344 = vsub.f32 %v339, %v343
      %v345 = vmul.f32 %v344, 1.442695
      %v346 = vpow.pop %v345
      %v347 = vsel %vm235, %v346, 0.0
      %348 = vadd.xlane.f32.xlu0 %v347
      %v349 = vpop.xlane.xlu0 %348
      %v350 = vrcp.pop %v349
      %v351 = vmul.f32 %v349, %v350
      %v352 = vsub.f32 1.0, %v351
      %v353 = vmul.f32 %v350, %v352
      %v354 = vadd.f32 %v350, %v353
      %vm355 = vweird.f32 %v349
      %vm356 = vweird.f32 %v350
      %vm357 = vmor %vm355, %vm356
      %v358 = vsel %vm357, %v350, %v354
      %v359 = vand.u32 2147483647, %v349
      %vm360 = vcmp.eq.f32.partialorder %v359, 8.507059e+37
      %v361 = vand.u32 %v349, 2147483648
      %v362 = vor.u32 1.1754944e-38, %v361
      %v363 = vsel %vm360, %v362, %v358
      %v364 = vmul.f32 %v346, %v363
      %v365 = vmul.f32 %v364, 0.25
      %v366 = vld [vmem:[%s287] sm:$0xff]
      %v367 = vadd.f32 %v366, %v365
      %368 = vst.msk [vmem:[%s287] sm:$0xff] %vm235, %v367
      %370 = vrot.lane.b32.xlu0 %v234, 120
      %v371 = vpop.permute.xlu0 %370
      %v374 = vsel %vm235, %v364, 0
      %376 = vmatpush.msra.mxu0 0.0
      %377 = vmatpush.msra.mxu0 0.0
      %378 = vmatpush.msra.mxu0 0.0
      %379 = vmatpush.msra.mxu0 0.0
      %380 = vmatpush.msra.mxu0 0.0
      %381 = vmatpush.msra.mxu0 0.0
      %382 = vmatpush.msra.mxu0 0.0
      %383 = vmatpush.msra.mxu0 0.0
      %384 = vmatpush.msra.mxu0 0.0
      %385 = vmatpush.msra.mxu0 0.0
      %386 = vmatpush.msra.mxu0 0.0
      %387 = vmatpush.msra.mxu0 0.0
      %388 = vmatpush.msra.mxu0 0.0
      %389 = vmatpush.msra.mxu0 0.0
      %390 = vmatpush.msra.mxu0 0.0
      %391 = vmatpush.msra.mxu0 %v371
      %392 = vmatmul.f32.gmra.mxu0 %v374
      %v393 = vpop.f32.mrf.mxu0
      %v394 = vadd.f32 0.0, %v393
      %395 = vdwg.mxu0
      %397 = vrot.lane.b32.xlu0 %v394, 8
      %v398 = vpop.permute.xlu0 %397
      %vm400 = vcmask 130112
      %401 = vst.msk [vmem:[#allocation5] sm:$0xff] %vm400, %v398
      %402 = vrot.lane.b32.xlu0 %v230, 112
      %v403 = vpop.permute.xlu0 %402
      %404 = vrot.lane.b32.xlu0 %v232, 112
      %v405 = vpop.permute.xlu0 %404
      %v406 = vsel %vm235, %v403, 0
      %v408 = vsel %vm235, %v405, 0
      %410 = vmatpush.xpose.msra.mxu0 0.0
      %411 = vmatpush.xpose.msra.mxu0 0.0
      %412 = vmatpush.xpose.msra.mxu0 0.0
      %413 = vmatpush.xpose.msra.mxu0 0.0
      %414 = vmatpush.xpose.msra.mxu0 0.0
      %415 = vmatpush.xpose.msra.mxu0 0.0
      %416 = vmatpush.xpose.msra.mxu0 0.0
      %417 = vmatpush.xpose.msra.mxu0 0.0
      %418 = vmatpush.xpose.msra.mxu0 0.0
      %419 = vmatpush.xpose.msra.mxu0 0.0
      %420 = vmatpush.xpose.msra.mxu0 0.0
      %421 = vmatpush.xpose.msra.mxu0 0.0
      %422 = vmatpush.xpose.msra.mxu0 0.0
      %423 = vmatpush.xpose.msra.mxu0 0.0
      %424 = vmatpush.xpose.msra.mxu0 0.0
      %425 = vmatpush.xpose.msra.mxu0 %v408
      %426 = vmatmul.f32.gmra.mxu0 %v406
      %v427 = vpop.f32.mrf.mxu0
      %v428 = vadd.f32 0.0, %v427
      %429 = vdwg.mxu0
      %v430 = vsel %vm235, %v428, -inf
      %431 = vmax.xlane.f32.xlu0 %v430
      %v432 = vpop.xlane.xlu0 %431
      %v433 = vsub.f32 %v428, %v432
      %v434 = vmul.f32 %v433, 1.442695
      %v435 = vpow.pop %v434
      %v436 = vsel %vm235, %v435, 0.0
      %437 = vadd.xlane.f32.xlu0 %v436
      %v438 = vpop.xlane.xlu0 %437
      %v439 = vrcp.pop %v438
      %v440 = vmul.f32 %v438, %v439
      %v441 = vsub.f32 1.0, %v440
      %v442 = vmul.f32 %v439, %v441
      %v443 = vadd.f32 %v439, %v442
      %vm444 = vweird.f32 %v438
      %vm445 = vweird.f32 %v439
      %vm446 = vmor %vm444, %vm445
      %v447 = vsel %vm446, %v439, %v443
      %v448 = vand.u32 2147483647, %v438
      %vm449 = vcmp.eq.f32.partialorder %v448, 8.507059e+37
      %v450 = vand.u32 %v438, 2147483648
      %v451 = vor.u32 1.1754944e-38, %v450
      %v452 = vsel %vm449, %v451, %v447
      %v453 = vmul.f32 %v435, %v452
      %v454 = vmul.f32 %v453, 0.25
      %v455 = vld [vmem:[%s287] sm:$0xff]
      %v456 = vadd.f32 %v455, %v454
      %457 = vst.msk [vmem:[%s287] sm:$0xff] %vm235, %v456
      %458 = vrot.lane.b32.xlu0 %v234, 112
      %v459 = vpop.permute.xlu0 %458
      %v462 = vsel %vm235, %v453, 0
      %464 = vmatpush.msra.mxu0 0.0
      %465 = vmatpush.msra.mxu0 0.0
      %466 = vmatpush.msra.mxu0 0.0
      %467 = vmatpush.msra.mxu0 0.0
      %468 = vmatpush.msra.mxu0 0.0
      %469 = vmatpush.msra.mxu0 0.0
      %470 = vmatpush.msra.mxu0 0.0
      %471 = vmatpush.msra.mxu0 0.0
      %472 = vmatpush.msra.mxu0 0.0
      %473 = vmatpush.msra.mxu0 0.0
      %474 = vmatpush.msra.mxu0 0.0
      %475 = vmatpush.msra.mxu0 0.0
      %476 = vmatpush.msra.mxu0 0.0
      %477 = vmatpush.msra.mxu0 0.0
      %478 = vmatpush.msra.mxu0 0.0
      %479 = vmatpush.msra.mxu0 %v459
      %480 = vmatmul.f32.gmra.mxu0 %v462
      %v481 = vpop.f32.mrf.mxu0
      %v482 = vadd.f32 0.0, %v481
      %483 = vdwg.mxu0
      %485 = vrot.lane.b32.xlu0 %v482, 16
      %v486 = vpop.permute.xlu0 %485
      %vm488 = vcmask 195712
      %489 = vst.msk [vmem:[#allocation5] sm:$0xff] %vm488, %v486
      %490 = vrot.lane.b32.xlu0 %v230, 104
      %v491 = vpop.permute.xlu0 %490
      %492 = vrot.lane.b32.xlu0 %v232, 104
      %v493 = vpop.permute.xlu0 %492
      %v494 = vsel %vm235, %v491, 0
      %v496 = vsel %vm235, %v493, 0
      %498 = vmatpush.xpose.msra.mxu0 0.0
      %499 = vmatpush.xpose.msra.mxu0 0.0
      %500 = vmatpush.xpose.msra.mxu0 0.0
      %501 = vmatpush.xpose.msra.mxu0 0.0
      %502 = vmatpush.xpose.msra.mxu0 0.0
      %503 = vmatpush.xpose.msra.mxu0 0.0
      %504 = vmatpush.xpose.msra.mxu0 0.0
      %505 = vmatpush.xpose.msra.mxu0 0.0
      %506 = vmatpush.xpose.msra.mxu0 0.0
      %507 = vmatpush.xpose.msra.mxu0 0.0
      %508 = vmatpush.xpose.msra.mxu0 0.0
      %509 = vmatpush.xpose.msra.mxu0 0.0
      %510 = vmatpush.xpose.msra.mxu0 0.0
      %511 = vmatpush.xpose.msra.mxu0 0.0
      %512 = vmatpush.xpose.msra.mxu0 0.0
      %513 = vmatpush.xpose.msra.mxu0 %v496
      %514 = vmatmul.f32.gmra.mxu0 %v494
      %v515 = vpop.f32.mrf.mxu0
      %v516 = vadd.f32 0.0, %v515
      %517 = vdwg.mxu0
      %v518 = vsel %vm235, %v516, -inf
      %519 = vmax.xlane.f32.xlu0 %v518
      %v520 = vpop.xlane.xlu0 %519
      %v521 = vsub.f32 %v516, %v520
      %v522 = vmul.f32 %v521, 1.442695
      %v523 = vpow.pop %v522
      %v524 = vsel %vm235, %v523, 0.0
      %525 = vadd.xlane.f32.xlu0 %v524
      %v526 = vpop.xlane.xlu0 %525
      %v527 = vrcp.pop %v526
      %v528 = vmul.f32 %v526, %v527
      %v529 = vsub.f32 1.0, %v528
      %v530 = vmul.f32 %v527, %v529
      %v531 = vadd.f32 %v527, %v530
      %vm532 = vweird.f32 %v526
      %vm533 = vweird.f32 %v527
      %vm534 = vmor %vm532, %vm533
      %v535 = vsel %vm534, %v527, %v531
      %v536 = vand.u32 2147483647, %v526
      %vm537 = vcmp.eq.f32.partialorder %v536, 8.507059e+37
      %v538 = vand.u32 %v526, 2147483648
      %v539 = vor.u32 1.1754944e-38, %v538
      %v540 = vsel %vm537, %v539, %v535
      %v541 = vmul.f32 %v523, %v540
      %v542 = vmul.f32 %v541, 0.25
      %v543 = vld [vmem:[%s287] sm:$0xff]
      %v544 = vadd.f32 %v543, %v542
      %545 = vst.msk [vmem:[%s287] sm:$0xff] %vm235, %v544
      %546 = vrot.lane.b32.xlu0 %v234, 104
      %v547 = vpop.permute.xlu0 %546
      %v550 = vsel %vm235, %v541, 0
      %552 = vmatpush.msra.mxu0 0.0
      %553 = vmatpush.msra.mxu0 0.0
      %554 = vmatpush.msra.mxu0 0.0
      %555 = vmatpush.msra.mxu0 0.0
      %556 = vmatpush.msra.mxu0 0.0
      %557 = vmatpush.msra.mxu0 0.0
      %558 = vmatpush.msra.mxu0 0.0
      %559 = vmatpush.msra.mxu0 0.0
      %560 = vmatpush.msra.mxu0 0.0
      %561 = vmatpush.msra.mxu0 0.0
      %562 = vmatpush.msra.mxu0 0.0
      %563 = vmatpush.msra.mxu0 0.0
      %564 = vmatpush.msra.mxu0 0.0
      %565 = vmatpush.msra.mxu0 0.0
      %566 = vmatpush.msra.mxu0 0.0
      %567 = vmatpush.msra.mxu0 %v547
      %568 = vmatmul.f32.gmra.mxu0 %v550
      %v569 = vpop.f32.mrf.mxu0
      %v570 = vadd.f32 0.0, %v569
      %571 = vdwg.mxu0
      %573 = vrot.lane.b32.xlu0 %v570, 24
      %v574 = vpop.permute.xlu0 %573
      %vm576 = vcmask 261312
      %577 = vst.msk [vmem:[#allocation5] sm:$0xff] %vm576, %v574
      %v578 = vld [vmem:[#allocation5] sm:$0xff]
      %v579 = vld [vmem:[#allocation14] sm:$0xff]
      %v580 = vld [vmem:[#allocation14 + $0x8] sm:$0xff]
      %v581 = vld [vmem:[#allocation14 + $0x10] sm:$0xff]
      %v582 = vld [vmem:[#allocation14 + $0x18] sm:$0xff]
      %v583 = vld [vmem:[%s8] sm:$0x1]
      %v585 = vperm.slane %v583, 0
      %v588 = vsel %vm124, %v578, 0
      %590 = vmatpush.msra.mxu0 0.0
      %591 = vmatpush.msra.mxu0 0.0
      %592 = vmatpush.msra.mxu0 0.0
      %593 = vmatpush.msra.mxu0 0.0
      %594 = vmatpush.msra.mxu0 0.0
      %595 = vmatpush.msra.mxu0 0.0
      %596 = vmatpush.msra.mxu0 0.0
      %597 = vmatpush.msra.mxu0 0.0
      %598 = vmatpush.msra.mxu0 0.0
      %599 = vmatpush.msra.mxu0 0.0
      %600 = vmatpush.msra.mxu0 0.0
      %601 = vmatpush.msra.mxu0 0.0
      %602 = vmatpush.msra.mxu0 %v582
      %603 = vmatpush.msra.mxu0 %v581
      %604 = vmatpush.msra.mxu0 %v580
      %605 = vmatpush.msra.mxu0 %v579
      %606 = vmatmul.f32.gmra.mxu0 %v588
      %v607 = vpop.f32.mrf.mxu0
      %v608 = vadd.f32 %v585, %v607
      %609 = vdwg.mxu0
      %s610 = scalar_lea.vmem [#allocation15], %s228
      %611 = vst.msk [vmem:[%s610] sm:$0xff] %vm124, %v608
    $region62: #{tpu_custom_call.1} parent=1 // loop_footer
      %s227 = sadd.s32 1, %s223
    $region63: #{tpu_custom_call.1} parent=1 // loop_footer_branch
      %222 = sbr.rel target = $region59
    $region64: #{tpu_custom_call.1} parent=1 // loop_exit
      _
    // Predicated region
    $region65: #{tpu_custom_call.1} parent=1 // pred_check
      _
    $region66: #{tpu_custom_call.1} parent=1 // pred_check_branch
      %613 = sbr.rel (0) target = $region68
    $region67: #{tpu_custom_call.1} parent=1 // pred_region
      %615 = vsyncadd [#allocation8], 0
      %s616 = sshll.u32 [#allocation15], 4
      %s617 = int_to_ptr.vmem [resolvable:$true] %s616
      %s618 = sshll.u32 %s9, 4
      %s619 = int_to_ptr.hbm [resolvable:$true] %s618
      %624 = dma.vmem_to_hbm [thread:$0]  %s617, 256, %s619, [#allocation8], 128, 128, 8
    $region68: #{tpu_custom_call.1} parent=1 // pred_fallthru
      _
    // Predicated region
    $region69: #{tpu_custom_call.1} parent=1 // pred_check
      _
    $region70: #{tpu_custom_call.1} parent=1 // pred_check_branch
      %626 = sbr.rel (0) target = $region72
    $region71: #{tpu_custom_call.1} parent=1 // pred_region
      %628 = vsyncadd [#allocation17], 0
      %s629 = sshll.u32 [#allocation16], 4
      %s630 = int_to_ptr.vmem [resolvable:$true] %s629
      %s631 = sshll.u32 %s10, 4
      %s632 = int_to_ptr.hbm [resolvable:$true] %s631
      %637 = dma.vmem_to_hbm [thread:$0]  %s630, 256, %s632, [#allocation17], 128, 128, 8
    $region72: #{tpu_custom_call.1} parent=1 // pred_fallthru
      _
    // Predicated region
    $region73: #{tpu_custom_call.1} parent=1 // pred_check
      _
    $region74: #{tpu_custom_call.1} parent=1 // pred_check_branch
      %639 = sbr.rel (0) target = $region76
    $region75: #{tpu_custom_call.1} parent=1 // pred_region
      %641 = dma.done [#allocation8], 256
    $region76: #{tpu_custom_call.1} parent=1 // pred_fallthru
      _
    // Predicated region
    $region77: #{tpu_custom_call.1} parent=1 // pred_check
      _
    $region78: #{tpu_custom_call.1} parent=1 // pred_check_branch
      %643 = sbr.rel (0) target = $region80
    $region79: #{tpu_custom_call.1} parent=1 // pred_region
      %645 = dma.done [#allocation17], 256
    $region80: #{tpu_custom_call.1} parent=1 // pred_fallthru
      _
    %646 = vsyncpa [#allocation7], 1
    %647 = vsyncpa [#allocation10], 1
    %648 = vsyncpa [#allocation13], 1
    %649 = vsyncpa [#allocation8], 1
    %650 = vsyncpa [#allocation17], 1

</llo_original>
